<compile_context>
chip_gen: v7x
topology: tpu7x:2x2x1
jax: 0.10.0
libtpu: 0.0.40
codegen_flags: <defaults>
</compile_context>

<pallas_src>
import functools

import jax
import jax.numpy as jnp
from jax.experimental import pallas as pl
from jax.experimental.pallas import tpu as pltpu


def _fnn_kernel(apply_sigmoid,
                uc_ref, city_ref, cat_ref,
                wf_uc_ref, wf_city_ref, wf_cat_ref, bf_ref,
                w2_ref, b2_ref, w3_ref, b3_ref,
                out_ref):
    """One batch tile: folded layer-1 (3 matmuls) + tanh / tanh / (sigmoid)."""
    acc = jnp.dot(uc_ref[...], wf_uc_ref[...],
                  preferred_element_type=jnp.float32)
    acc = acc + jnp.dot(city_ref[...], wf_city_ref[...],
                        preferred_element_type=jnp.float32)
    acc = acc + jnp.dot(cat_ref[...], wf_cat_ref[...],
                        preferred_element_type=jnp.float32)
    h = jnp.tanh(acc + bf_ref[...])
    h2 = jnp.tanh(
        jnp.dot(h.astype(w2_ref.dtype), w2_ref[...],
                preferred_element_type=jnp.float32) + b2_ref[...])
    y = (jnp.dot(h2.astype(w3_ref.dtype), w3_ref[...],
                 preferred_element_type=jnp.float32) + b3_ref[...])
    if apply_sigmoid:
        y = jax.nn.sigmoid(y)
    out_ref[...] = y.astype(out_ref.dtype)


def _linear_init(key, fan_in, fan_out):
    """Deterministic PyTorch-nn.Linear-style init; weight returned as [in, out]."""
    kw, kb = jax.random.split(key)
    bound = 1.0 / jnp.sqrt(jnp.float32(fan_in))
    w = jax.random.uniform(kw, (fan_in, fan_out), jnp.float32, -bound, bound)
    b = jax.random.uniform(kb, (1, fan_out), jnp.float32, -bound, bound)
    return w, b


def init_fnn_params(key, num_user_compliment, num_business_city,
                    num_business_category, num_features):
    num_decoder = num_features * 3 + 3
    h1 = int(round(num_decoder / 2, 0))
    h2 = int(round(num_decoder / 4, 0))
    keys = jax.random.split(key, 9)
    p = {}
    p["uc_w"], p["uc_b"] = _linear_init(keys[0], num_user_compliment, num_features)
    p["city_w"], p["city_b"] = _linear_init(keys[1], num_business_city, num_features)
    p["cat_w"], p["cat_b"] = _linear_init(keys[2], num_business_category, num_features)
    p["ucw_w"], p["ucw_b"] = _linear_init(keys[3], num_user_compliment, 1)
    p["cityw_w"], p["cityw_b"] = _linear_init(keys[4], num_business_city, 1)
    p["catw_w"], p["catw_b"] = _linear_init(keys[5], num_business_category, 1)
    p["dec1_w"], p["dec1_b"] = _linear_init(keys[6], num_decoder, h1)
    p["dec2_w"], p["dec2_b"] = _linear_init(keys[7], h1, h2)
    p["dec3_w"], p["dec3_b"] = _linear_init(keys[8], h2, 1)
    return p


def fnn_forward(params, uc, city, cat, methods="classification",
                b_tile=None, compute_dtype=jnp.float32):
    B = uc.shape[0]
    F = params["uc_w"].shape[1]
    n_uc = params["uc_w"].shape[0]
    n_city = params["city_w"].shape[0]
    n_cat = params["cat_w"].shape[0]
    h1_dim = params["dec1_w"].shape[1]
    h2_dim = params["dec2_w"].shape[1]
    apply_sigmoid = (methods != "regression")

    # --- Algebraic fold of the (purely linear) embedding stage into decoder
    #     layer 1, done once in XLA on tiny weight matrices, one folded weight
    #     per input stream.  dec1_w row layout matches
    #     concat(e_uc, e_city, e_cat, w_uc, w_city, w_cat).
    d1 = params["dec1_w"]                                               # [3F+3, h1]
    wf_uc = params["uc_w"] @ d1[0 * F:1 * F] + params["ucw_w"] @ d1[3 * F + 0:3 * F + 1]
    wf_city = params["city_w"] @ d1[1 * F:2 * F] + params["cityw_w"] @ d1[3 * F + 1:3 * F + 2]
    wf_cat = params["cat_w"] @ d1[2 * F:3 * F] + params["catw_w"] @ d1[3 * F + 2:3 * F + 3]
    all_b = jnp.concatenate(
        [params["uc_b"], params["city_b"], params["cat_b"],
         params["ucw_b"], params["cityw_b"], params["catw_b"]], axis=-1)  # [1, 3F+3]
    b_fold = all_b @ d1 + params["dec1_b"]                              # [1, h1]

    # --- Batch tiling: one step for small batches (no padding, no per-step
    #     overhead); big tiles + cdiv grid (uneven last block) for large ones.
    if b_tile is None:
        b_tile = B if B <= 4096 else 4096
    b_tile = int(b_tile)
    if b_tile >= B:
        b_tile = B                       # full-dim block: exempt from (8, .) rule
    else:
        b_tile = max(8, (b_tile // 8) * 8)  # block second-minor must be % 8 == 0
    grid = (pl.cdiv(B, b_tile),)

    # --- Optional reduced-precision streaming operands (f32 accumulation).
    #     Default f32 -> the astype calls are no-ops (no extra HBM traffic).
    uc = uc.astype(compute_dtype)
    city = city.astype(compute_dtype)
    cat = cat.astype(compute_dtype)
    wf_uc = wf_uc.astype(compute_dtype)
    wf_city = wf_city.astype(compute_dtype)
    wf_cat = wf_cat.astype(compute_dtype)
    w2 = params["dec2_w"].astype(compute_dtype)
    w3 = params["dec3_w"].astype(compute_dtype)
    b_fold = b_fold.astype(jnp.float32)
    b2 = params["dec2_b"].astype(jnp.float32)
    b3 = params["dec3_b"].astype(jnp.float32)

    kernel = functools.partial(_fnn_kernel, apply_sigmoid)

    def tiled(n_cols):
        # Batch-tiled input stream (full feature dim -> one contiguous DMA).
        return pl.BlockSpec((b_tile, n_cols), lambda i: (i, 0))

    def resident(shape):
        # Whole-array block, same block every grid step -> stays VMEM-resident.
        return pl.BlockSpec(shape, lambda i: (0, 0))

    out = pl.pallas_call(
        kernel,
        out_shape=jax.ShapeDtypeStruct((B, 1), jnp.float32),
        grid=grid,
        in_specs=[
            tiled(n_uc), tiled(n_city), tiled(n_cat),
            resident((n_uc, h1_dim)),
            resident((n_city, h1_dim)),
            resident((n_cat, h1_dim)),
            resident((1, h1_dim)),
            resident((h1_dim, h2_dim)),
            resident((1, h2_dim)),
            resident((h2_dim, 1)),
            resident((1, 1)),
        ],
        out_specs=pl.BlockSpec((b_tile, 1), lambda i: (i, 0)),
        compiler_params=pltpu.CompilerParams(
            dimension_semantics=("parallel",),
            vmem_limit_bytes=32 * 1024 * 1024,
        ),
    )(uc, city, cat, wf_uc, wf_city, wf_cat, b_fold, w2, b2, w3, b3)

    return out


def fnn_reference(params, uc, city, cat, methods="classification"):
    """Plain-JAX reference mirroring the PyTorch forward (concat version)."""
    e_uc = uc @ params["uc_w"] + params["uc_b"]
    e_city = city @ params["city_w"] + params["city_b"]
    e_cat = cat @ params["cat_w"] + params["cat_b"]
    w_uc = uc @ params["ucw_w"] + params["ucw_b"]
    w_city = city @ params["cityw_w"] + params["cityw_b"]
    w_cat = cat @ params["catw_w"] + params["catw_b"]
    allf = jnp.concatenate([e_uc, e_city, e_cat, w_uc, w_city, w_cat], axis=-1)
    h = jnp.tanh(allf @ params["dec1_w"] + params["dec1_b"])
    h2 = jnp.tanh(h @ params["dec2_w"] + params["dec2_b"])
    x = h2 @ params["dec3_w"] + params["dec3_b"]
    if methods == "regression":
        return x
    return jax.nn.sigmoid(x)


if __name__ == "__main__":
    # Small, module-consistent shapes; B chosen so both the single-tile path
    # (default b_tile) and the multi-step / uneven-last-block path (b_tile=128)
    # are exercised.
    B = 300
    num_user_compliment = 16
    num_business_city = 32
    num_business_category = 24
    num_features = 8

    key = jax.random.PRNGKey(0)
    k_params, k_uc, k_city, k_cat = jax.random.split(key, 4)

    params = init_fnn_params(k_params, num_user_compliment, num_business_city,
                             num_business_category, num_features)

    uc = jax.random.normal(k_uc, (B, num_user_compliment), jnp.float32)
    city = jax.random.normal(k_city, (B, num_business_city), jnp.float32)
    cat = jax.random.normal(k_cat, (B, num_business_category), jnp.float32)

    # Classification branch (sigmoid), default tiling: single grid step.
    out = fnn_forward(params, uc, city, cat, methods="classification")
    out = jax.block_until_ready(out)
    ref = fnn_reference(params, uc, city, cat, methods="classification")
    assert out.shape == (B, 1), out.shape
    assert jnp.allclose(out, ref, atol=1e-3, rtol=1e-3)

    # Regression branch (no sigmoid), small tiles: multi-step grid with an
    # uneven (out-of-bounds-masked) last block.
    out_r = fnn_forward(params, uc, city, cat, methods="regression", b_tile=128)
    out_r = jax.block_until_ready(out_r)
    ref_r = fnn_reference(params, uc, city, cat, methods="regression")
    assert out_r.shape == (B, 1), out_r.shape
    assert jnp.allclose(out_r, ref_r, atol=1e-3, rtol=1e-3)

    print("KERNEL_OK")
</pallas_src>

<mosaic_0001>
module attributes {stable_mosaic.version = 11 : i64} {
  func.func @_fnn_kernel(%arg0: i32, %arg1: memref<300x16xf32, #tpu.memory_space<vmem>>, %arg2: memref<300x32xf32, #tpu.memory_space<vmem>>, %arg3: memref<300x24xf32, #tpu.memory_space<vmem>>, %arg4: memref<16x14xf32, #tpu.memory_space<vmem>>, %arg5: memref<32x14xf32, #tpu.memory_space<vmem>>, %arg6: memref<24x14xf32, #tpu.memory_space<vmem>>, %arg7: memref<1x14xf32, #tpu.memory_space<vmem>>, %arg8: memref<14x7xf32, #tpu.memory_space<vmem>>, %arg9: memref<1x7xf32, #tpu.memory_space<vmem>>, %arg10: memref<7x1xf32, #tpu.memory_space<vmem>>, %arg11: memref<1x1xf32, #tpu.memory_space<vmem>>, %arg12: memref<300x1xf32, #tpu.memory_space<vmem>>) attributes {dimension_semantics = [#tpu.dimension_semantics<parallel>], iteration_bounds = array<i64: 1>, scalar_prefetch = 0 : i64, scratch_operands = 0 : i64, tpu.core_type = #tpu.core_type<tc>, window_params = [{transform_indices = @transform_0, window_bounds = array<i64: 300, 16>}, {transform_indices = @transform_1, window_bounds = array<i64: 300, 32>}, {transform_indices = @transform_2, window_bounds = array<i64: 300, 24>}, {pipeline_mode = #tpu.pipeline_mode<synchronous>, transform_indices = @transform_3, window_bounds = array<i64: 16, 14>}, {pipeline_mode = #tpu.pipeline_mode<synchronous>, transform_indices = @transform_4, window_bounds = array<i64: 32, 14>}, {pipeline_mode = #tpu.pipeline_mode<synchronous>, transform_indices = @transform_5, window_bounds = array<i64: 24, 14>}, {pipeline_mode = #tpu.pipeline_mode<synchronous>, transform_indices = @transform_6, window_bounds = array<i64: 1, 14>}, {pipeline_mode = #tpu.pipeline_mode<synchronous>, transform_indices = @transform_7, window_bounds = array<i64: 14, 7>}, {pipeline_mode = #tpu.pipeline_mode<synchronous>, transform_indices = @transform_8, window_bounds = array<i64: 1, 7>}, {pipeline_mode = #tpu.pipeline_mode<synchronous>, transform_indices = @transform_9, window_bounds = array<i64: 7, 1>}, {pipeline_mode = #tpu.pipeline_mode<synchronous>, transform_indices = @transform_10, window_bounds = array<i64: 1, 1>}, {transform_indices = @transform_11, window_bounds = array<i64: 300, 1>}]} {
    %c0 = arith.constant 0 : index
    %c0_0 = arith.constant 0 : index
    %0 = vector.load %arg1[%c0, %c0_0] : memref<300x16xf32, #tpu.memory_space<vmem>>, vector<300x16xf32>
    %c0_1 = arith.constant 0 : index
    %c0_2 = arith.constant 0 : index
    %1 = vector.load %arg4[%c0_1, %c0_2] : memref<16x14xf32, #tpu.memory_space<vmem>>, vector<16x14xf32>
    %cst = arith.constant dense<0.000000e+00> : vector<300x14xf32>
    %2 = tpu.matmul %0, %1, %cst {dimension_numbers = #tpu.dot_dimension_numbers<[1], [0], [0], [1], [0, 0, 1, 1], [], []>} : vector<300x16xf32>, vector<16x14xf32>, vector<300x14xf32> -> vector<300x14xf32>
    %c0_3 = arith.constant 0 : index
    %c0_4 = arith.constant 0 : index
    %3 = vector.load %arg2[%c0_3, %c0_4] : memref<300x32xf32, #tpu.memory_space<vmem>>, vector<300x32xf32>
    %c0_5 = arith.constant 0 : index
    %c0_6 = arith.constant 0 : index
    %4 = vector.load %arg5[%c0_5, %c0_6] : memref<32x14xf32, #tpu.memory_space<vmem>>, vector<32x14xf32>
    %cst_7 = arith.constant dense<0.000000e+00> : vector<300x14xf32>
    %5 = tpu.matmul %3, %4, %cst_7 {dimension_numbers = #tpu.dot_dimension_numbers<[1], [0], [0], [1], [0, 0, 1, 1], [], []>} : vector<300x32xf32>, vector<32x14xf32>, vector<300x14xf32> -> vector<300x14xf32>
    %6 = arith.addf %2, %5 : vector<300x14xf32>
    %c0_8 = arith.constant 0 : index
    %c0_9 = arith.constant 0 : index
    %7 = vector.load %arg3[%c0_8, %c0_9] : memref<300x24xf32, #tpu.memory_space<vmem>>, vector<300x24xf32>
    %c0_10 = arith.constant 0 : index
    %c0_11 = arith.constant 0 : index
    %8 = vector.load %arg6[%c0_10, %c0_11] : memref<24x14xf32, #tpu.memory_space<vmem>>, vector<24x14xf32>
    %cst_12 = arith.constant dense<0.000000e+00> : vector<300x14xf32>
    %9 = tpu.matmul %7, %8, %cst_12 {dimension_numbers = #tpu.dot_dimension_numbers<[1], [0], [0], [1], [0, 0, 1, 1], [], []>} : vector<300x24xf32>, vector<24x14xf32>, vector<300x14xf32> -> vector<300x14xf32>
    %10 = arith.addf %6, %9 : vector<300x14xf32>
    %c0_13 = arith.constant 0 : index
    %c0_14 = arith.constant 0 : index
    %11 = vector.load %arg7[%c0_13, %c0_14] : memref<1x14xf32, #tpu.memory_space<vmem>>, vector<1x14xf32>
    %12 = vector.broadcast %11 : vector<1x14xf32> to vector<300x14xf32>
    %13 = arith.addf %10, %12 : vector<300x14xf32>
    %14 = math.tanh %13 : vector<300x14xf32>
    %c0_15 = arith.constant 0 : index
    %c0_16 = arith.constant 0 : index
    %15 = vector.load %arg8[%c0_15, %c0_16] : memref<14x7xf32, #tpu.memory_space<vmem>>, vector<14x7xf32>
    %cst_17 = arith.constant dense<0.000000e+00> : vector<300x7xf32>
    %16 = tpu.matmul %14, %15, %cst_17 {dimension_numbers = #tpu.dot_dimension_numbers<[1], [0], [0], [1], [0, 0, 1, 1], [], []>} : vector<300x14xf32>, vector<14x7xf32>, vector<300x7xf32> -> vector<300x7xf32>
    %c0_18 = arith.constant 0 : index
    %c0_19 = arith.constant 0 : index
    %17 = vector.load %arg9[%c0_18, %c0_19] : memref<1x7xf32, #tpu.memory_space<vmem>>, vector<1x7xf32>
    %18 = vector.broadcast %17 : vector<1x7xf32> to vector<300x7xf32>
    %19 = arith.addf %16, %18 : vector<300x7xf32>
    %20 = math.tanh %19 : vector<300x7xf32>
    %c0_20 = arith.constant 0 : index
    %c0_21 = arith.constant 0 : index
    %21 = vector.load %arg10[%c0_20, %c0_21] : memref<7x1xf32, #tpu.memory_space<vmem>>, vector<7x1xf32>
    %cst_22 = arith.constant dense<0.000000e+00> : vector<300x1xf32>
    %22 = tpu.matmul %20, %21, %cst_22 {dimension_numbers = #tpu.dot_dimension_numbers<[1], [0], [0], [1], [0, 0, 1, 1], [], []>} : vector<300x7xf32>, vector<7x1xf32>, vector<300x1xf32> -> vector<300x1xf32>
    %c0_23 = arith.constant 0 : index
    %c0_24 = arith.constant 0 : index
    %23 = vector.load %arg11[%c0_23, %c0_24] : memref<1x1xf32, #tpu.memory_space<vmem>>, vector<1x1xf32>
    %24 = vector.broadcast %23 : vector<1x1xf32> to vector<300x1xf32>
    %25 = arith.addf %22, %24 : vector<300x1xf32>
    %26 = arith.negf %25 : vector<300x1xf32>
    %27 = math.exp %26 : vector<300x1xf32>
    %cst_25 = arith.constant 1.000000e+00 : f32
    %28 = vector.broadcast %cst_25 : f32 to vector<300x1xf32>
    %29 = arith.addf %28, %27 : vector<300x1xf32>
    %30 = arith.divf %28, %29 : vector<300x1xf32>
    %c0_26 = arith.constant 0 : index
    %c0_27 = arith.constant 0 : index
    %31 = vector.load %arg12[%c0_26, %c0_27] : memref<300x1xf32, #tpu.memory_space<vmem>>, vector<300x1xf32>
    tpu.vector_store %arg12[%c0_26, %c0_27], %30 {strides = array<i32>} : memref<300x1xf32, #tpu.memory_space<vmem>>, vector<300x1xf32>,
    return
  }
  func.func @transform_0(%arg0: i32) -> (i32, i32) {
    %c0_i32 = arith.constant 0 : i32
    %c0_i32_0 = arith.constant 0 : i32
    return %arg0, %c0_i32 : i32, i32
  }
  func.func @transform_1(%arg0: i32) -> (i32, i32) {
    %c0_i32 = arith.constant 0 : i32
    %c0_i32_0 = arith.constant 0 : i32
    return %arg0, %c0_i32 : i32, i32
  }
  func.func @transform_2(%arg0: i32) -> (i32, i32) {
    %c0_i32 = arith.constant 0 : i32
    %c0_i32_0 = arith.constant 0 : i32
    return %arg0, %c0_i32 : i32, i32
  }
  func.func @transform_3(%arg0: i32) -> (i32, i32) {
    %c0_i32 = arith.constant 0 : i32
    %c0_i32_0 = arith.constant 0 : i32
    %c0_i32_1 = arith.constant 0 : i32
    return %c0_i32, %c0_i32_0 : i32, i32
  }
  func.func @transform_4(%arg0: i32) -> (i32, i32) {
    %c0_i32 = arith.constant 0 : i32
    %c0_i32_0 = arith.constant 0 : i32
    %c0_i32_1 = arith.constant 0 : i32
    return %c0_i32, %c0_i32_0 : i32, i32
  }
  func.func @transform_5(%arg0: i32) -> (i32, i32) {
    %c0_i32 = arith.constant 0 : i32
    %c0_i32_0 = arith.constant 0 : i32
    %c0_i32_1 = arith.constant 0 : i32
    return %c0_i32, %c0_i32_0 : i32, i32
  }
  func.func @transform_6(%arg0: i32) -> (i32, i32) {
    %c0_i32 = arith.constant 0 : i32
    %c0_i32_0 = arith.constant 0 : i32
    %c0_i32_1 = arith.constant 0 : i32
    return %c0_i32, %c0_i32_0 : i32, i32
  }
  func.func @transform_7(%arg0: i32) -> (i32, i32) {
    %c0_i32 = arith.constant 0 : i32
    %c0_i32_0 = arith.constant 0 : i32
    %c0_i32_1 = arith.constant 0 : i32
    return %c0_i32, %c0_i32_0 : i32, i32
  }
  func.func @transform_8(%arg0: i32) -> (i32, i32) {
    %c0_i32 = arith.constant 0 : i32
    %c0_i32_0 = arith.constant 0 : i32
    %c0_i32_1 = arith.constant 0 : i32
    return %c0_i32, %c0_i32_0 : i32, i32
  }
  func.func @transform_9(%arg0: i32) -> (i32, i32) {
    %c0_i32 = arith.constant 0 : i32
    %c0_i32_0 = arith.constant 0 : i32
    %c0_i32_1 = arith.constant 0 : i32
    return %c0_i32, %c0_i32_0 : i32, i32
  }
  func.func @transform_10(%arg0: i32) -> (i32, i32) {
    %c0_i32 = arith.constant 0 : i32
    %c0_i32_0 = arith.constant 0 : i32
    %c0_i32_1 = arith.constant 0 : i32
    return %c0_i32, %c0_i32_0 : i32, i32
  }
  func.func @transform_11(%arg0: i32) -> (i32, i32) {
    %c0_i32 = arith.constant 0 : i32
    %c0_i32_0 = arith.constant 0 : i32
    return %arg0, %c0_i32 : i32, i32
  }
}

</mosaic_0001>

<llo_original>
// kernel: tpu_custom_call.1
$region0: #{tpu_custom_call.1}
  #allocation0 [shape = 'u32[]', space=smem, size = 0x4, offset = 0x4, fixed_abs, tag = 'smem constant byte address 0x4 - core index']
  #allocation1 [shape = 'u32[144,128]{1,0:T(1,128)}', space=vmem, size = 0x12000, scoped, tag = 'internal scratch']
  #allocation2 [shape = 'f32[1,1]{1,0:T(1,128)S(1)}', space=vmem, size = 0x200, scoped, tag = 'scoped memory for tpu_custom_call.1']
  %s0 = inlined_call_operand.vmem [shape: f32[300,16], index: 0, kind: input, shape index: {}]
  %s1 = inlined_call_operand.vmem [shape: f32[300,32], index: 1, kind: input, shape index: {}]
  %s2 = inlined_call_operand.vmem [shape: f32[300,24], index: 2, kind: input, shape index: {}]
  %s3 = inlined_call_operand.vmem [shape: f32[16,14], index: 3, kind: input, shape index: {}]
  %s4 = inlined_call_operand.vmem [shape: f32[32,14], index: 4, kind: input, shape index: {}]
  %s5 = inlined_call_operand.vmem [shape: f32[24,14], index: 5, kind: input, shape index: {}]
  %s6 = inlined_call_operand.vmem [shape: f32[1,14], index: 6, kind: input, shape index: {}]
  %s7 = inlined_call_operand.vmem [shape: f32[14,7], index: 7, kind: input, shape index: {}]
  %s8 = inlined_call_operand.vmem [shape: f32[1,7], index: 8, kind: input, shape index: {}]
  %s9 = inlined_call_operand.vmem [shape: f32[7,1], index: 9, kind: input, shape index: {}]
  %s10 = inlined_call_operand.<no memory space> [shape: f32[1,1], index: 10, kind: input, shape index: {}]
  %s11 = inlined_call_operand.vmem [shape: f32[300,1], index: 11, kind: output, shape index: {}]
  %s12 = sld [smem:[#allocation0]]
  $region54: #{tpu_custom_call.1} parent=0
    _
  %s14 = ssub.s32 1, %s12
  %s15 = scalar_select 0, %s14, %s12
  %v16 = vstv %s10
  %17 = vst [vmem:[#allocation2] sm:$0x1] %v16
  // Predicated region
  $region2: #{tpu_custom_call.1} parent=0 // pred_check
    _
  $region3: #{tpu_custom_call.1} parent=0 // pred_check_branch
    %19 = sbr.rel (0) target = $region5
  $region4: #{tpu_custom_call.1} parent=0 // pred_region
    _
  $region5: #{tpu_custom_call.1} parent=0 // pred_fallthru
    _
  // Predicated region
  $region6: #{tpu_custom_call.1} parent=0 // pred_check
    _
  $region7: #{tpu_custom_call.1} parent=0 // pred_check_branch
    %21 = sbr.rel (0) target = $region9
  $region8: #{tpu_custom_call.1} parent=0 // pred_region
    _
  $region9: #{tpu_custom_call.1} parent=0 // pred_fallthru
    _
  // Predicated region
  $region10: #{tpu_custom_call.1} parent=0 // pred_check
    _
  $region11: #{tpu_custom_call.1} parent=0 // pred_check_branch
    %23 = sbr.rel (0) target = $region13
  $region12: #{tpu_custom_call.1} parent=0 // pred_region
    _
  $region13: #{tpu_custom_call.1} parent=0 // pred_fallthru
    _
  // Predicated region
  $region14: #{tpu_custom_call.1} parent=0 // pred_check
    _
  $region15: #{tpu_custom_call.1} parent=0 // pred_check_branch
    %25 = sbr.rel (0) target = $region17
  $region16: #{tpu_custom_call.1} parent=0 // pred_region
    _
  $region17: #{tpu_custom_call.1} parent=0 // pred_fallthru
    _
  // Predicated region
  $region18: #{tpu_custom_call.1} parent=0 // pred_check
    _
  $region19: #{tpu_custom_call.1} parent=0 // pred_check_branch
    %27 = sbr.rel (0) target = $region21
  $region20: #{tpu_custom_call.1} parent=0 // pred_region
    _
  $region21: #{tpu_custom_call.1} parent=0 // pred_fallthru
    _
  // Predicated region
  $region22: #{tpu_custom_call.1} parent=0 // pred_check
    _
  $region23: #{tpu_custom_call.1} parent=0 // pred_check_branch
    %29 = sbr.rel (0) target = $region25
  $region24: #{tpu_custom_call.1} parent=0 // pred_region
    _
  $region25: #{tpu_custom_call.1} parent=0 // pred_fallthru
    _
  // Predicated region
  $region26: #{tpu_custom_call.1} parent=0 // pred_check
    _
  $region27: #{tpu_custom_call.1} parent=0 // pred_check_branch
    %31 = sbr.rel (0) target = $region29
  $region28: #{tpu_custom_call.1} parent=0 // pred_region
    _
  $region29: #{tpu_custom_call.1} parent=0 // pred_fallthru
    _
  // Predicated region
  $region30: #{tpu_custom_call.1} parent=0 // pred_check
    _
  $region31: #{tpu_custom_call.1} parent=0 // pred_check_branch
    %33 = sbr.rel (0) target = $region33
  $region32: #{tpu_custom_call.1} parent=0 // pred_region
    _
  $region33: #{tpu_custom_call.1} parent=0 // pred_fallthru
    _
  // Predicated region
  $region34: #{tpu_custom_call.1} parent=0 // pred_check
    _
  $region35: #{tpu_custom_call.1} parent=0 // pred_check_branch
    %35 = sbr.rel (0) target = $region37
  $region36: #{tpu_custom_call.1} parent=0 // pred_region
    _
  $region37: #{tpu_custom_call.1} parent=0 // pred_fallthru
    _
  // Predicated region
  $region38: #{tpu_custom_call.1} parent=0 // pred_check
    _
  $region39: #{tpu_custom_call.1} parent=0 // pred_check_branch
    %37 = sbr.rel (0) target = $region41
  $region40: #{tpu_custom_call.1} parent=0 // pred_region
    _
  $region41: #{tpu_custom_call.1} parent=0 // pred_fallthru
    _
  // Predicated region
  $region42: #{tpu_custom_call.1} parent=0 // pred_check
    _
  $region43: #{tpu_custom_call.1} parent=0 // pred_check_branch
    %39 = sbr.rel (0) target = $region45
  $region44: #{tpu_custom_call.1} parent=0 // pred_region
    _
  $region45: #{tpu_custom_call.1} parent=0 // pred_fallthru
    _
  %v40 = vld [vmem:[%s0] sm:$0xff]
  %v41 = vld [vmem:[%s0 + $0x8] sm:$0xff]
  %v42 = vld [vmem:[%s0 + $0x10] sm:$0xff]
  %v43 = vld [vmem:[%s0 + $0x18] sm:$0xff]
  %v44 = vld [vmem:[%s0 + $0x20] sm:$0xff]
  %v45 = vld [vmem:[%s0 + $0x28] sm:$0xff]
  %v46 = vld [vmem:[%s0 + $0x30] sm:$0xff]
  %v47 = vld [vmem:[%s0 + $0x38] sm:$0xff]
  %v48 = vld [vmem:[%s0 + $0x40] sm:$0xff]
  %v49 = vld [vmem:[%s0 + $0x48] sm:$0xff]
  %v50 = vld [vmem:[%s0 + $0x50] sm:$0xff]
  %v51 = vld [vmem:[%s0 + $0x58] sm:$0xff]
  %v52 = vld [vmem:[%s0 + $0x60] sm:$0xff]
  %v53 = vld [vmem:[%s0 + $0x68] sm:$0xff]
  %v54 = vld [vmem:[%s0 + $0x70] sm:$0xff]
  %v55 = vld [vmem:[%s0 + $0x78] sm:$0xff]
  %v56 = vld [vmem:[%s0 + $0x80] sm:$0xff]
  %v57 = vld [vmem:[%s0 + $0x88] sm:$0xff]
  %v58 = vld [vmem:[%s0 + $0x90] sm:$0xff]
  %v59 = vld [vmem:[%s0 + $0x98] sm:$0xff]
  %v60 = vld [vmem:[%s0 + $0xa0] sm:$0xff]
  %v61 = vld [vmem:[%s0 + $0xa8] sm:$0xff]
  %v62 = vld [vmem:[%s0 + $0xb0] sm:$0xff]
  %v63 = vld [vmem:[%s0 + $0xb8] sm:$0xff]
  %v64 = vld [vmem:[%s0 + $0xc0] sm:$0xff]
  %v65 = vld [vmem:[%s0 + $0xc8] sm:$0xff]
  %v66 = vld [vmem:[%s0 + $0xd0] sm:$0xff]
  %v67 = vld [vmem:[%s0 + $0xd8] sm:$0xff]
  %v68 = vld [vmem:[%s0 + $0xe0] sm:$0xff]
  %v69 = vld [vmem:[%s0 + $0xe8] sm:$0xff]
  %v70 = vld [vmem:[%s0 + $0xf0] sm:$0xff]
  %v71 = vld [vmem:[%s0 + $0xf8] sm:$0xff]
  %v72 = vld [vmem:[%s0 + $0x100] sm:$0xff]
  %v73 = vld [vmem:[%s0 + $0x108] sm:$0xff]
  %v74 = vld [vmem:[%s0 + $0x110] sm:$0xff]
  %v75 = vld [vmem:[%s0 + $0x118] sm:$0xff]
  %v76 = vld [vmem:[%s0 + $0x120] sm:$0xff]
  %v77 = vld [vmem:[%s0 + $0x128] sm:$0xf]
  %v78 = vld [vmem:[%s3] sm:$0xff]
  %v79 = vld [vmem:[%s3 + $0x8] sm:$0xff]
  %v80 = vld [vmem:[%s1] sm:$0xff]
  %v81 = vld [vmem:[%s1 + $0x8] sm:$0xff]
  %v82 = vld [vmem:[%s1 + $0x10] sm:$0xff]
  %v83 = vld [vmem:[%s1 + $0x18] sm:$0xff]
  %v84 = vld [vmem:[%s1 + $0x20] sm:$0xff]
  %v85 = vld [vmem:[%s1 + $0x28] sm:$0xff]
  %v86 = vld [vmem:[%s1 + $0x30] sm:$0xff]
  %v87 = vld [vmem:[%s1 + $0x38] sm:$0xff]
  %v88 = vld [vmem:[%s1 + $0x40] sm:$0xff]
  %v89 = vld [vmem:[%s1 + $0x48] sm:$0xff]
  %v90 = vld [vmem:[%s1 + $0x50] sm:$0xff]
  %v91 = vld [vmem:[%s1 + $0x58] sm:$0xff]
  %v92 = vld [vmem:[%s1 + $0x60] sm:$0xff]
  %v93 = vld [vmem:[%s1 + $0x68] sm:$0xff]
  %v94 = vld [vmem:[%s1 + $0x70] sm:$0xff]
  %v95 = vld [vmem:[%s1 + $0x78] sm:$0xff]
  %v96 = vld [vmem:[%s1 + $0x80] sm:$0xff]
  %v97 = vld [vmem:[%s1 + $0x88] sm:$0xff]
  %v98 = vld [vmem:[%s1 + $0x90] sm:$0xff]
  %v99 = vld [vmem:[%s1 + $0x98] sm:$0xff]
  %v100 = vld [vmem:[%s1 + $0xa0] sm:$0xff]
  %v101 = vld [vmem:[%s1 + $0xa8] sm:$0xff]
  %v102 = vld [vmem:[%s1 + $0xb0] sm:$0xff]
  %v103 = vld [vmem:[%s1 + $0xb8] sm:$0xff]
  %v104 = vld [vmem:[%s1 + $0xc0] sm:$0xff]
  %v105 = vld [vmem:[%s1 + $0xc8] sm:$0xff]
  %v106 = vld [vmem:[%s1 + $0xd0] sm:$0xff]
  %v107 = vld [vmem:[%s1 + $0xd8] sm:$0xff]
  %v108 = vld [vmem:[%s1 + $0xe0] sm:$0xff]
  %v109 = vld [vmem:[%s1 + $0xe8] sm:$0xff]
  %v110 = vld [vmem:[%s1 + $0xf0] sm:$0xff]
  %v111 = vld [vmem:[%s1 + $0xf8] sm:$0xff]
  %v112 = vld [vmem:[%s1 + $0x100] sm:$0xff]
  %v113 = vld [vmem:[%s1 + $0x108] sm:$0xff]
  %v114 = vld [vmem:[%s1 + $0x110] sm:$0xff]
  %v115 = vld [vmem:[%s1 + $0x118] sm:$0xff]
  %v116 = vld [vmem:[%s1 + $0x120] sm:$0xff]
  %v117 = vld [vmem:[%s1 + $0x128] sm:$0xf]
  %v118 = vld [vmem:[%s4] sm:$0xff]
  %v119 = vld [vmem:[%s4 + $0x8] sm:$0xff]
  %v120 = vld [vmem:[%s4 + $0x10] sm:$0xff]
  %v121 = vld [vmem:[%s4 + $0x18] sm:$0xff]
  %vm122 = vcmask 261120
  %v124 = vsel %vm122, %v80, 0
  %v127 = vsel %vm122, %v81, 0
  %v130 = vsel %vm122, %v82, 0
  %v133 = vsel %vm122, %v83, 0
  %v136 = vsel %vm122, %v84, 0
  %v139 = vsel %vm122, %v85, 0
  %v142 = vsel %vm122, %v86, 0
  %v145 = vsel %vm122, %v87, 0
  %v148 = vsel %vm122, %v88, 0
  %v151 = vsel %vm122, %v89, 0
  %v154 = vsel %vm122, %v90, 0
  %v157 = vsel %vm122, %v91, 0
  %v160 = vsel %vm122, %v92, 0
  %v163 = vsel %vm122, %v93, 0
  %v166 = vsel %vm122, %v94, 0
  %v169 = vsel %vm122, %v95, 0
  %v172 = vsel %vm122, %v96, 0
  %v175 = vsel %vm122, %v97, 0
  %v178 = vsel %vm122, %v98, 0
  %v181 = vsel %vm122, %v99, 0
  %v184 = vsel %vm122, %v100, 0
  %v187 = vsel %vm122, %v101, 0
  %v190 = vsel %vm122, %v102, 0
  %v193 = vsel %vm122, %v103, 0
  %v196 = vsel %vm122, %v104, 0
  %v199 = vsel %vm122, %v105, 0
  %v202 = vsel %vm122, %v106, 0
  %v205 = vsel %vm122, %v107, 0
  %v208 = vsel %vm122, %v108, 0
  %v211 = vsel %vm122, %v109, 0
  %v214 = vsel %vm122, %v110, 0
  %v217 = vsel %vm122, %v111, 0
  %v220 = vsel %vm122, %v112, 0
  %v223 = vsel %vm122, %v113, 0
  %v226 = vsel %vm122, %v114, 0
  %v229 = vsel %vm122, %v115, 0
  %v232 = vsel %vm122, %v116, 0
  %v235 = vsel %vm122, %v117, 0
  %237 = vmatprep.subr.mxu0 0.0
  %238 = vmatpush1.msra.mxu0 %v118
  %239 = vmatprep.subr.mxu0 0.0
  %240 = vmatpush1.msra.mxu0 %v119
  %241 = vmatprep.subr.mxu0 0.0
  %242 = vmatpush1.msra.mxu0 %v120
  %243 = vmatprep.subr.mxu0 0.0
  %244 = vmatpush1.msra.mxu0 %v121
  %245 = vmatprep.subr.mxu0 0.0
  %246 = vmatpush1.msra.mxu0 0.0
  %247 = vmatprep.subr.mxu0 0.0
  %248 = vmatpush1.msra.mxu0 0.0
  %249 = vmatprep.subr.mxu0 0.0
  %250 = vmatpush1.msra.mxu0 0.0
  %251 = vmatprep.subr.mxu0 0.0
  %252 = vmatpush1.msra.mxu0 0.0
  %253 = vmatprep.subr.mxu0 0.0
  %254 = vmatpush1.msra.mxu0 0.0
  %255 = vmatprep.subr.mxu0 0.0
  %256 = vmatpush1.msra.mxu0 0.0
  %257 = vmatprep.subr.mxu0 0.0
  %258 = vmatpush1.msra.mxu0 0.0
  %259 = vmatprep.subr.mxu0 0.0
  %260 = vmatpush1.msra.mxu0 0.0
  %261 = vmatprep.subr.mxu0 0.0
  %262 = vmatpush1.msra.mxu0 0.0
  %263 = vmatprep.subr.mxu0 0.0
  %264 = vmatpush1.msra.mxu0 0.0
  %265 = vmatprep.subr.mxu0 0.0
  %266 = vmatpush1.msra.mxu0 0.0
  %267 = vmatprep.subr.mxu0 0.0
  %268 = vmatpush1.msra.mxu0 0.0
  %269 = vmatprep.subr.mxu0 0.0
  %270 = vmatpush1.msra.mxu0 0.0
  %271 = vmatprep.subr.mxu0 0.0
  %272 = vmatpush1.msra.mxu0 0.0
  %273 = vmatprep.subr.mxu0 0.0
  %274 = vmatpush1.msra.mxu0 0.0
  %275 = vmatprep.subr.mxu0 0.0
  %276 = vmatpush1.msra.mxu0 0.0
  %277 = vmatprep.subr.mxu0 0.0
  %278 = vmatpush1.msra.mxu0 0.0
  %279 = vmatprep.subr.mxu0 0.0
  %280 = vmatpush1.msra.mxu0 0.0
  %281 = vmatprep.subr.mxu0 0.0
  %282 = vmatpush1.msra.mxu0 0.0
  %283 = vmatprep.subr.mxu0 0.0
  %284 = vmatpush1.msra.mxu0 0.0
  %285 = vmatprep.subr.mxu0 0.0
  %286 = vmatpush1.msra.mxu0 0.0
  %287 = vmatprep.subr.mxu0 0.0
  %288 = vmatpush1.msra.mxu0 0.0
  %289 = vmatprep.subr.mxu0 0.0
  %290 = vmatpush1.msra.mxu0 0.0
  %291 = vmatprep.subr.mxu0 0.0
  %292 = vmatpush1.msra.mxu0 0.0
  %293 = vmatprep.subr.mxu0 0.0
  %294 = vmatpush1.msra.mxu0 0.0
  %295 = vmatprep.subr.mxu0 0.0
  %296 = vmatpush1.msra.mxu0 0.0
  %297 = vmatprep.subr.mxu0 0.0
  %298 = vmatpush1.msra.mxu0 0.0
  %299 = vmatprep.subr.mxu0 0.0
  %300 = vmatpush1.msra.mxu0 0.0
  %301 = vmatprep.mubr.f32.mxu0 0.0
  %302 = vmatmul.mubr.f32.gmra.mrb[0].mxu0 %v124
  %v303 = vpop.f32.mrb[0].mxu0
  %v304 = vadd.f32 0.0, %v303
  %v305 = vpop.f32.mrb[0].mxu0
  %306 = vmatprep.mubr.f32.mxu0 0.0
  %307 = vmatmul.mubr.f32.gmra.mrb[0].mxu0 %v127
  %v308 = vpop.f32.mrb[0].mxu0
  %v309 = vadd.f32 0.0, %v308
  %v310 = vpop.f32.mrb[0].mxu0
  %311 = vmatprep.mubr.f32.mxu0 0.0
  %312 = vmatmul.mubr.f32.gmra.mrb[0].mxu0 %v130
  %v313 = vpop.f32.mrb[0].mxu0
  %v314 = vadd.f32 0.0, %v313
  %v315 = vpop.f32.mrb[0].mxu0
  %316 = vmatprep.mubr.f32.mxu0 0.0
  %317 = vmatmul.mubr.f32.gmra.mrb[0].mxu0 %v133
  %v318 = vpop.f32.mrb[0].mxu0
  %v319 = vadd.f32 0.0, %v318
  %v320 = vpop.f32.mrb[0].mxu0
  %321 = vmatprep.mubr.f32.mxu0 0.0
  %322 = vmatmul.mubr.f32.gmra.mrb[0].mxu0 %v136
  %v323 = vpop.f32.mrb[0].mxu0
  %v324 = vadd.f32 0.0, %v323
  %v325 = vpop.f32.mrb[0].mxu0
  %326 = vmatprep.mubr.f32.mxu0 0.0
  %327 = vmatmul.mubr.f32.gmra.mrb[0].mxu0 %v139
  %v328 = vpop.f32.mrb[0].mxu0
  %v329 = vadd.f32 0.0, %v328
  %v330 = vpop.f32.mrb[0].mxu0
  %331 = vmatprep.mubr.f32.mxu0 0.0
  %332 = vmatmul.mubr.f32.gmra.mrb[0].mxu0 %v142
  %v333 = vpop.f32.mrb[0].mxu0
  %v334 = vadd.f32 0.0, %v333
  %v335 = vpop.f32.mrb[0].mxu0
  %336 = vmatprep.mubr.f32.mxu0 0.0
  %337 = vmatmul.mubr.f32.gmra.mrb[0].mxu0 %v145
  %v338 = vpop.f32.mrb[0].mxu0
  %v339 = vadd.f32 0.0, %v338
  %v340 = vpop.f32.mrb[0].mxu0
  %341 = vmatprep.mubr.f32.mxu0 0.0
  %342 = vmatmul.mubr.f32.gmra.mrb[0].mxu0 %v148
  %v343 = vpop.f32.mrb[0].mxu0
  %v344 = vadd.f32 0.0, %v343
  %v345 = vpop.f32.mrb[0].mxu0
  %346 = vmatprep.mubr.f32.mxu0 0.0
  %347 = vmatmul.mubr.f32.gmra.mrb[0].mxu0 %v151
  %v348 = vpop.f32.mrb[0].mxu0
  %v349 = vadd.f32 0.0, %v348
  %v350 = vpop.f32.mrb[0].mxu0
  %351 = vmatprep.mubr.f32.mxu0 0.0
  %352 = vmatmul.mubr.f32.gmra.mrb[0].mxu0 %v154
  %v353 = vpop.f32.mrb[0].mxu0
  %v354 = vadd.f32 0.0, %v353
  %v355 = vpop.f32.mrb[0].mxu0
  %356 = vmatprep.mubr.f32.mxu0 0.0
  %357 = vmatmul.mubr.f32.gmra.mrb[0].mxu0 %v157
  %v358 = vpop.f32.mrb[0].mxu0
  %v359 = vadd.f32 0.0, %v358
  %v360 = vpop.f32.mrb[0].mxu0
  %361 = vmatprep.mubr.f32.mxu0 0.0
  %362 = vmatmul.mubr.f32.gmra.mrb[0].mxu0 %v160
  %v363 = vpop.f32.mrb[0].mxu0
  %v364 = vadd.f32 0.0, %v363
  %v365 = vpop.f32.mrb[0].mxu0
  %366 = vmatprep.mubr.f32.mxu0 0.0
  %367 = vmatmul.mubr.f32.gmra.mrb[0].mxu0 %v163
  %v368 = vpop.f32.mrb[0].mxu0
  %v369 = vadd.f32 0.0, %v368
  %v370 = vpop.f32.mrb[0].mxu0
  %371 = vmatprep.mubr.f32.mxu0 0.0
  %372 = vmatmul.mubr.f32.gmra.mrb[0].mxu0 %v166
  %v373 = vpop.f32.mrb[0].mxu0
  %v374 = vadd.f32 0.0, %v373
  %v375 = vpop.f32.mrb[0].mxu0
  %376 = vmatprep.mubr.f32.mxu0 0.0
  %377 = vmatmul.mubr.f32.gmra.mrb[0].mxu0 %v169
  %v378 = vpop.f32.mrb[0].mxu0
  %v379 = vadd.f32 0.0, %v378
  %v380 = vpop.f32.mrb[0].mxu0
  %381 = vmatprep.mubr.f32.mxu0 0.0
  %382 = vmatmul.mubr.f32.gmra.mrb[0].mxu0 %v172
  %v383 = vpop.f32.mrb[0].mxu0
  %v384 = vadd.f32 0.0, %v383
  %v385 = vpop.f32.mrb[0].mxu0
  %386 = vmatprep.mubr.f32.mxu0 0.0
  %387 = vmatmul.mubr.f32.gmra.mrb[0].mxu0 %v175
  %v388 = vpop.f32.mrb[0].mxu0
  %v389 = vadd.f32 0.0, %v388
  %v390 = vpop.f32.mrb[0].mxu0
  %391 = vmatprep.mubr.f32.mxu0 0.0
  %392 = vmatmul.mubr.f32.gmra.mrb[0].mxu0 %v178
  %v393 = vpop.f32.mrb[0].mxu0
  %v394 = vadd.f32 0.0, %v393
  %v395 = vpop.f32.mrb[0].mxu0
  %396 = vmatprep.mubr.f32.mxu0 0.0
  %397 = vmatmul.mubr.f32.gmra.mrb[0].mxu0 %v181
  %v398 = vpop.f32.mrb[0].mxu0
  %v399 = vadd.f32 0.0, %v398
  %v400 = vpop.f32.mrb[0].mxu0
  %401 = vmatprep.mubr.f32.mxu0 0.0
  %402 = vmatmul.mubr.f32.gmra.mrb[0].mxu0 %v184
  %v403 = vpop.f32.mrb[0].mxu0
  %v404 = vadd.f32 0.0, %v403
  %v405 = vpop.f32.mrb[0].mxu0
  %406 = vmatprep.mubr.f32.mxu0 0.0
  %407 = vmatmul.mubr.f32.gmra.mrb[0].mxu0 %v187
  %v408 = vpop.f32.mrb[0].mxu0
  %v409 = vadd.f32 0.0, %v408
  %v410 = vpop.f32.mrb[0].mxu0
  %411 = vmatprep.mubr.f32.mxu0 0.0
  %412 = vmatmul.mubr.f32.gmra.mrb[0].mxu0 %v190
  %v413 = vpop.f32.mrb[0].mxu0
  %v414 = vadd.f32 0.0, %v413
  %v415 = vpop.f32.mrb[0].mxu0
  %416 = vmatprep.mubr.f32.mxu0 0.0
  %417 = vmatmul.mubr.f32.gmra.mrb[0].mxu0 %v193
  %v418 = vpop.f32.mrb[0].mxu0
  %v419 = vadd.f32 0.0, %v418
  %v420 = vpop.f32.mrb[0].mxu0
  %421 = vmatprep.mubr.f32.mxu0 0.0
  %422 = vmatmul.mubr.f32.gmra.mrb[0].mxu0 %v196
  %v423 = vpop.f32.mrb[0].mxu0
  %v424 = vadd.f32 0.0, %v423
  %v425 = vpop.f32.mrb[0].mxu0
  %426 = vmatprep.mubr.f32.mxu0 0.0
  %427 = vmatmul.mubr.f32.gmra.mrb[0].mxu0 %v199
  %v428 = vpop.f32.mrb[0].mxu0
  %v429 = vadd.f32 0.0, %v428
  %v430 = vpop.f32.mrb[0].mxu0
  %431 = vmatprep.mubr.f32.mxu0 0.0
  %432 = vmatmul.mubr.f32.gmra.mrb[0].mxu0 %v202
  %v433 = vpop.f32.mrb[0].mxu0
  %v434 = vadd.f32 0.0, %v433
  %v435 = vpop.f32.mrb[0].mxu0
  %436 = vmatprep.mubr.f32.mxu0 0.0
  %437 = vmatmul.mubr.f32.gmra.mrb[0].mxu0 %v205
  %v438 = vpop.f32.mrb[0].mxu0
  %v439 = vadd.f32 0.0, %v438
  %v440 = vpop.f32.mrb[0].mxu0
  %441 = vmatprep.mubr.f32.mxu0 0.0
  %442 = vmatmul.mubr.f32.gmra.mrb[0].mxu0 %v208
  %v443 = vpop.f32.mrb[0].mxu0
  %v444 = vadd.f32 0.0, %v443
  %v445 = vpop.f32.mrb[0].mxu0
  %446 = vmatprep.mubr.f32.mxu0 0.0
  %447 = vmatmul.mubr.f32.gmra.mrb[0].mxu0 %v211
  %v448 = vpop.f32.mrb[0].mxu0
  %v449 = vadd.f32 0.0, %v448
  %v450 = vpop.f32.mrb[0].mxu0
  %451 = vmatprep.mubr.f32.mxu0 0.0
  %452 = vmatmul.mubr.f32.gmra.mrb[0].mxu0 %v214
  %v453 = vpop.f32.mrb[0].mxu0
  %v454 = vadd.f32 0.0, %v453
  %v455 = vpop.f32.mrb[0].mxu0
  %456 = vmatprep.mubr.f32.mxu0 0.0
  %457 = vmatmul.mubr.f32.gmra.mrb[0].mxu0 %v217
  %v458 = vpop.f32.mrb[0].mxu0
  %v459 = vadd.f32 0.0, %v458
  %v460 = vpop.f32.mrb[0].mxu0
  %461 = vmatprep.mubr.f32.mxu0 0.0
  %462 = vmatmul.mubr.f32.gmra.mrb[0].mxu0 %v220
  %v463 = vpop.f32.mrb[0].mxu0
  %v464 = vadd.f32 0.0, %v463
  %v465 = vpop.f32.mrb[0].mxu0
  %466 = vmatprep.mubr.f32.mxu0 0.0
  %467 = vmatmul.mubr.f32.gmra.mrb[0].mxu0 %v223
  %v468 = vpop.f32.mrb[0].mxu0
  %v469 = vadd.f32 0.0, %v468
  %v470 = vpop.f32.mrb[0].mxu0
  %471 = vmatprep.mubr.f32.mxu0 0.0
  %472 = vmatmul.mubr.f32.gmra.mrb[0].mxu0 %v226
  %v473 = vpop.f32.mrb[0].mxu0
  %v474 = vadd.f32 0.0, %v473
  %v475 = vpop.f32.mrb[0].mxu0
  %476 = vmatprep.mubr.f32.mxu0 0.0
  %477 = vmatmul.mubr.f32.gmra.mrb[0].mxu0 %v229
  %v478 = vpop.f32.mrb[0].mxu0
  %v479 = vadd.f32 0.0, %v478
  %v480 = vpop.f32.mrb[0].mxu0
  %481 = vmatprep.mubr.f32.mxu0 0.0
  %482 = vmatmul.mubr.f32.gmra.mrb[0].mxu0 %v232
  %v483 = vpop.f32.mrb[0].mxu0
  %v484 = vadd.f32 0.0, %v483
  %v485 = vpop.f32.mrb[0].mxu0
  %486 = vmatprep.mubr.f32.mxu0 0.0
  %487 = vmatmul.mubr.f32.gmra.mrb[0].mxu0 %v235
  %v488 = vpop.f32.mrb[0].mxu0
  %v489 = vadd.f32 0.0, %v488
  %v490 = vpop.f32.mrb[0].mxu0
  %491 = vdwg.mxu0
  %vm492 = vcmask 130048
  %v494 = vsel %vm492, %v40, 0
  %v497 = vsel %vm492, %v41, 0
  %v500 = vsel %vm492, %v42, 0
  %v503 = vsel %vm492, %v43, 0
  %v506 = vsel %vm492, %v44, 0
  %v509 = vsel %vm492, %v45, 0
  %v512 = vsel %vm492, %v46, 0
  %v515 = vsel %vm492, %v47, 0
  %v518 = vsel %vm492, %v48, 0
  %v521 = vsel %vm492, %v49, 0
  %v524 = vsel %vm492, %v50, 0
  %v527 = vsel %vm492, %v51, 0
  %v530 = vsel %vm492, %v52, 0
  %v533 = vsel %vm492, %v53, 0
  %v536 = vsel %vm492, %v54, 0
  %v539 = vsel %vm492, %v55, 0
  %v542 = vsel %vm492, %v56, 0
  %v545 = vsel %vm492, %v57, 0
  %v548 = vsel %vm492, %v58, 0
  %v551 = vsel %vm492, %v59, 0
  %v554 = vsel %vm492, %v60, 0
  %v557 = vsel %vm492, %v61, 0
  %v560 = vsel %vm492, %v62, 0
  %v563 = vsel %vm492, %v63, 0
  %v566 = vsel %vm492, %v64, 0
  %v569 = vsel %vm492, %v65, 0
  %v572 = vsel %vm492, %v66, 0
  %v575 = vsel %vm492, %v67, 0
  %v578 = vsel %vm492, %v68, 0
  %v581 = vsel %vm492, %v69, 0
  %v584 = vsel %vm492, %v70, 0
  %v587 = vsel %vm492, %v71, 0
  %v590 = vsel %vm492, %v72, 0
  %v593 = vsel %vm492, %v73, 0
  %v596 = vsel %vm492, %v74, 0
  %v599 = vsel %vm492, %v75, 0
  %v602 = vsel %vm492, %v76, 0
  %v605 = vsel %vm492, %v77, 0
  %607 = vmatprep.subr.mxu0 0.0
  %608 = vmatpush1.msra.mxu0 %v78
  %609 = vmatprep.subr.mxu0 0.0
  %610 = vmatpush1.msra.mxu0 %v79
  %611 = vmatprep.subr.mxu0 0.0
  %612 = vmatpush1.msra.mxu0 0.0
  %613 = vmatprep.subr.mxu0 0.0
  %614 = vmatpush1.msra.mxu0 0.0
  %615 = vmatprep.subr.mxu0 0.0
  %616 = vmatpush1.msra.mxu0 0.0
  %617 = vmatprep.subr.mxu0 0.0
  %618 = vmatpush1.msra.mxu0 0.0
  %619 = vmatprep.subr.mxu0 0.0
  %620 = vmatpush1.msra.mxu0 0.0
  %621 = vmatprep.subr.mxu0 0.0
  %622 = vmatpush1.msra.mxu0 0.0
  %623 = vmatprep.subr.mxu0 0.0
  %624 = vmatpush1.msra.mxu0 0.0
  %625 = vmatprep.subr.mxu0 0.0
  %626 = vmatpush1.msra.mxu0 0.0
  %627 = vmatprep.subr.mxu0 0.0
  %628 = vmatpush1.msra.mxu0 0.0
  %629 = vmatprep.subr.mxu0 0.0
  %630 = vmatpush1.msra.mxu0 0.0
  %631 = vmatprep.subr.mxu0 0.0
  %632 = vmatpush1.msra.mxu0 0.0
  %633 = vmatprep.subr.mxu0 0.0
  %634 = vmatpush1.msra.mxu0 0.0
  %635 = vmatprep.subr.mxu0 0.0
  %636 = vmatpush1.msra.mxu0 0.0
  %637 = vmatprep.subr.mxu0 0.0
  %638 = vmatpush1.msra.mxu0 0.0
  %639 = vmatprep.subr.mxu0 0.0
  %640 = vmatpush1.msra.mxu0 0.0
  %641 = vmatprep.subr.mxu0 0.0
  %642 = vmatpush1.msra.mxu0 0.0
  %643 = vmatprep.subr.mxu0 0.0
  %644 = vmatpush1.msra.mxu0 0.0
  %645 = vmatprep.subr.mxu0 0.0
  %646 = vmatpush1.msra.mxu0 0.0
  %647 = vmatprep.subr.mxu0 0.0
  %648 = vmatpush1.msra.mxu0 0.0
  %649 = vmatprep.subr.mxu0 0.0
  %650 = vmatpush1.msra.mxu0 0.0
  %651 = vmatprep.subr.mxu0 0.0
  %652 = vmatpush1.msra.mxu0 0.0
  %653 = vmatprep.subr.mxu0 0.0
  %654 = vmatpush1.msra.mxu0 0.0
  %655 = vmatprep.subr.mxu0 0.0
  %656 = vmatpush1.msra.mxu0 0.0
  %657 = vmatprep.subr.mxu0 0.0
  %658 = vmatpush1.msra.mxu0 0.0
  %659 = vmatprep.subr.mxu0 0.0
  %660 = vmatpush1.msra.mxu0 0.0
  %661 = vmatprep.subr.mxu0 0.0
  %662 = vmatpush1.msra.mxu0 0.0
  %663 = vmatprep.subr.mxu0 0.0
  %664 = vmatpush1.msra.mxu0 0.0
  %665 = vmatprep.subr.mxu0 0.0
  %666 = vmatpush1.msra.mxu0 0.0
  %667 = vmatprep.subr.mxu0 0.0
  %668 = vmatpush1.msra.mxu0 0.0
  %669 = vmatprep.subr.mxu0 0.0
  %670 = vmatpush1.msra.mxu0 0.0
  %671 = vmatprep.mubr.f32.mxu0 0.0
  %672 = vmatmul.mubr.f32.gmra.mrb[0].mxu0 %v494
  %v673 = vpop.f32.mrb[0].mxu0
  %v674 = vadd.f32 %v304, %v673
  %v675 = vpop.f32.mrb[0].mxu0
  %676 = vmatprep.mubr.f32.mxu0 0.0
  %677 = vmatmul.mubr.f32.gmra.mrb[0].mxu0 %v497
  %v678 = vpop.f32.mrb[0].mxu0
  %v679 = vadd.f32 %v309, %v678
  %v680 = vpop.f32.mrb[0].mxu0
  %681 = vmatprep.mubr.f32.mxu0 0.0
  %682 = vmatmul.mubr.f32.gmra.mrb[0].mxu0 %v500
  %v683 = vpop.f32.mrb[0].mxu0
  %v684 = vadd.f32 %v314, %v683
  %v685 = vpop.f32.mrb[0].mxu0
  %686 = vmatprep.mubr.f32.mxu0 0.0
  %687 = vmatmul.mubr.f32.gmra.mrb[0].mxu0 %v503
  %v688 = vpop.f32.mrb[0].mxu0
  %v689 = vadd.f32 %v319, %v688
  %v690 = vpop.f32.mrb[0].mxu0
  %691 = vmatprep.mubr.f32.mxu0 0.0
  %692 = vmatmul.mubr.f32.gmra.mrb[0].mxu0 %v506
  %v693 = vpop.f32.mrb[0].mxu0
  %v694 = vadd.f32 %v324, %v693
  %v695 = vpop.f32.mrb[0].mxu0
  %696 = vmatprep.mubr.f32.mxu0 0.0
  %697 = vmatmul.mubr.f32.gmra.mrb[0].mxu0 %v509
  %v698 = vpop.f32.mrb[0].mxu0
  %v699 = vadd.f32 %v329, %v698
  %v700 = vpop.f32.mrb[0].mxu0
  %701 = vmatprep.mubr.f32.mxu0 0.0
  %702 = vmatmul.mubr.f32.gmra.mrb[0].mxu0 %v512
  %v703 = vpop.f32.mrb[0].mxu0
  %v704 = vadd.f32 %v334, %v703
  %v705 = vpop.f32.mrb[0].mxu0
  %706 = vmatprep.mubr.f32.mxu0 0.0
  %707 = vmatmul.mubr.f32.gmra.mrb[0].mxu0 %v515
  %v708 = vpop.f32.mrb[0].mxu0
  %v709 = vadd.f32 %v339, %v708
  %v710 = vpop.f32.mrb[0].mxu0
  %711 = vmatprep.mubr.f32.mxu0 0.0
  %712 = vmatmul.mubr.f32.gmra.mrb[0].mxu0 %v518
  %v713 = vpop.f32.mrb[0].mxu0
  %v714 = vadd.f32 %v344, %v713
  %v715 = vpop.f32.mrb[0].mxu0
  %716 = vmatprep.mubr.f32.mxu0 0.0
  %717 = vmatmul.mubr.f32.gmra.mrb[0].mxu0 %v521
  %v718 = vpop.f32.mrb[0].mxu0
  %v719 = vadd.f32 %v349, %v718
  %v720 = vpop.f32.mrb[0].mxu0
  %721 = vmatprep.mubr.f32.mxu0 0.0
  %722 = vmatmul.mubr.f32.gmra.mrb[0].mxu0 %v524
  %v723 = vpop.f32.mrb[0].mxu0
  %v724 = vadd.f32 %v354, %v723
  %v725 = vpop.f32.mrb[0].mxu0
  %726 = vmatprep.mubr.f32.mxu0 0.0
  %727 = vmatmul.mubr.f32.gmra.mrb[0].mxu0 %v527
  %v728 = vpop.f32.mrb[0].mxu0
  %v729 = vadd.f32 %v359, %v728
  %v730 = vpop.f32.mrb[0].mxu0
  %731 = vmatprep.mubr.f32.mxu0 0.0
  %732 = vmatmul.mubr.f32.gmra.mrb[0].mxu0 %v530
  %v733 = vpop.f32.mrb[0].mxu0
  %v734 = vadd.f32 %v364, %v733
  %v735 = vpop.f32.mrb[0].mxu0
  %736 = vmatprep.mubr.f32.mxu0 0.0
  %737 = vmatmul.mubr.f32.gmra.mrb[0].mxu0 %v533
  %v738 = vpop.f32.mrb[0].mxu0
  %v739 = vadd.f32 %v369, %v738
  %v740 = vpop.f32.mrb[0].mxu0
  %741 = vmatprep.mubr.f32.mxu0 0.0
  %742 = vmatmul.mubr.f32.gmra.mrb[0].mxu0 %v536
  %v743 = vpop.f32.mrb[0].mxu0
  %v744 = vadd.f32 %v374, %v743
  %v745 = vpop.f32.mrb[0].mxu0
  %746 = vmatprep.mubr.f32.mxu0 0.0
  %747 = vmatmul.mubr.f32.gmra.mrb[0].mxu0 %v539
  %v748 = vpop.f32.mrb[0].mxu0
  %v749 = vadd.f32 %v379, %v748
  %v750 = vpop.f32.mrb[0].mxu0
  %751 = vmatprep.mubr.f32.mxu0 0.0
  %752 = vmatmul.mubr.f32.gmra.mrb[0].mxu0 %v542
  %v753 = vpop.f32.mrb[0].mxu0
  %v754 = vadd.f32 %v384, %v753
  %v755 = vpop.f32.mrb[0].mxu0
  %756 = vmatprep.mubr.f32.mxu0 0.0
  %757 = vmatmul.mubr.f32.gmra.mrb[0].mxu0 %v545
  %v758 = vpop.f32.mrb[0].mxu0
  %v759 = vadd.f32 %v389, %v758
  %v760 = vpop.f32.mrb[0].mxu0
  %761 = vmatprep.mubr.f32.mxu0 0.0
  %762 = vmatmul.mubr.f32.gmra.mrb[0].mxu0 %v548
  %v763 = vpop.f32.mrb[0].mxu0
  %v764 = vadd.f32 %v394, %v763
  %v765 = vpop.f32.mrb[0].mxu0
  %766 = vmatprep.mubr.f32.mxu0 0.0
  %767 = vmatmul.mubr.f32.gmra.mrb[0].mxu0 %v551
  %v768 = vpop.f32.mrb[0].mxu0
  %v769 = vadd.f32 %v399, %v768
  %v770 = vpop.f32.mrb[0].mxu0
  %771 = vmatprep.mubr.f32.mxu0 0.0
  %772 = vmatmul.mubr.f32.gmra.mrb[0].mxu0 %v554
  %v773 = vpop.f32.mrb[0].mxu0
  %v774 = vadd.f32 %v404, %v773
  %v775 = vpop.f32.mrb[0].mxu0
  %776 = vmatprep.mubr.f32.mxu0 0.0
  %777 = vmatmul.mubr.f32.gmra.mrb[0].mxu0 %v557
  %v778 = vpop.f32.mrb[0].mxu0
  %v779 = vadd.f32 %v409, %v778
  %v780 = vpop.f32.mrb[0].mxu0
  %781 = vmatprep.mubr.f32.mxu0 0.0
  %782 = vmatmul.mubr.f32.gmra.mrb[0].mxu0 %v560
  %v783 = vpop.f32.mrb[0].mxu0
  %v784 = vadd.f32 %v414, %v783
  %v785 = vpop.f32.mrb[0].mxu0
  %786 = vmatprep.mubr.f32.mxu0 0.0
  %787 = vmatmul.mubr.f32.gmra.mrb[0].mxu0 %v563
  %v788 = vpop.f32.mrb[0].mxu0
  %v789 = vadd.f32 %v419, %v788
  %v790 = vpop.f32.mrb[0].mxu0
  %791 = vmatprep.mubr.f32.mxu0 0.0
  %792 = vmatmul.mubr.f32.gmra.mrb[0].mxu0 %v566
  %v793 = vpop.f32.mrb[0].mxu0
  %v794 = vadd.f32 %v424, %v793
  %v795 = vpop.f32.mrb[0].mxu0
  %796 = vmatprep.mubr.f32.mxu0 0.0
  %797 = vmatmul.mubr.f32.gmra.mrb[0].mxu0 %v569
  %v798 = vpop.f32.mrb[0].mxu0
  %v799 = vadd.f32 %v429, %v798
  %v800 = vpop.f32.mrb[0].mxu0
  %801 = vmatprep.mubr.f32.mxu0 0.0
  %802 = vmatmul.mubr.f32.gmra.mrb[0].mxu0 %v572
  %v803 = vpop.f32.mrb[0].mxu0
  %v804 = vadd.f32 %v434, %v803
  %v805 = vpop.f32.mrb[0].mxu0
  %806 = vmatprep.mubr.f32.mxu0 0.0
  %807 = vmatmul.mubr.f32.gmra.mrb[0].mxu0 %v575
  %v808 = vpop.f32.mrb[0].mxu0
  %v809 = vadd.f32 %v439, %v808
  %v810 = vpop.f32.mrb[0].mxu0
  %811 = vmatprep.mubr.f32.mxu0 0.0
  %812 = vmatmul.mubr.f32.gmra.mrb[0].mxu0 %v578
  %v813 = vpop.f32.mrb[0].mxu0
  %v814 = vadd.f32 %v444, %v813
  %v815 = vpop.f32.mrb[0].mxu0
  %816 = vmatprep.mubr.f32.mxu0 0.0
  %817 = vmatmul.mubr.f32.gmra.mrb[0].mxu0 %v581
  %v818 = vpop.f32.mrb[0].mxu0
  %v819 = vadd.f32 %v449, %v818
  %v820 = vpop.f32.mrb[0].mxu0
  %821 = vmatprep.mubr.f32.mxu0 0.0
  %822 = vmatmul.mubr.f32.gmra.mrb[0].mxu0 %v584
  %v823 = vpop.f32.mrb[0].mxu0
  %v824 = vadd.f32 %v454, %v823
  %v825 = vpop.f32.mrb[0].mxu0
  %826 = vmatprep.mubr.f32.mxu0 0.0
  %827 = vmatmul.mubr.f32.gmra.mrb[0].mxu0 %v587
  %v828 = vpop.f32.mrb[0].mxu0
  %v829 = vadd.f32 %v459, %v828
  %v830 = vpop.f32.mrb[0].mxu0
  %831 = vmatprep.mubr.f32.mxu0 0.0
  %832 = vmatmul.mubr.f32.gmra.mrb[0].mxu0 %v590
  %v833 = vpop.f32.mrb[0].mxu0
  %v834 = vadd.f32 %v464, %v833
  %v835 = vpop.f32.mrb[0].mxu0
  %836 = vmatprep.mubr.f32.mxu0 0.0
  %837 = vmatmul.mubr.f32.gmra.mrb[0].mxu0 %v593
  %v838 = vpop.f32.mrb[0].mxu0
  %v839 = vadd.f32 %v469, %v838
  %v840 = vpop.f32.mrb[0].mxu0
  %841 = vmatprep.mubr.f32.mxu0 0.0
  %842 = vmatmul.mubr.f32.gmra.mrb[0].mxu0 %v596
  %v843 = vpop.f32.mrb[0].mxu0
  %v844 = vadd.f32 %v474, %v843
  %v845 = vpop.f32.mrb[0].mxu0
  %846 = vmatprep.mubr.f32.mxu0 0.0
  %847 = vmatmul.mubr.f32.gmra.mrb[0].mxu0 %v599
  %v848 = vpop.f32.mrb[0].mxu0
  %v849 = vadd.f32 %v479, %v848
  %v850 = vpop.f32.mrb[0].mxu0
  %851 = vmatprep.mubr.f32.mxu0 0.0
  %852 = vmatmul.mubr.f32.gmra.mrb[0].mxu0 %v602
  %v853 = vpop.f32.mrb[0].mxu0
  %v854 = vadd.f32 %v484, %v853
  %v855 = vpop.f32.mrb[0].mxu0
  %856 = vmatprep.mubr.f32.mxu0 0.0
  %857 = vmatmul.mubr.f32.gmra.mrb[0].mxu0 %v605
  %v858 = vpop.f32.mrb[0].mxu0
  %v859 = vadd.f32 %v489, %v858
  %v860 = vpop.f32.mrb[0].mxu0
  %861 = vdwg.mxu0
  %v862 = vld [vmem:[%s2] sm:$0xff]
  %v863 = vld [vmem:[%s2 + $0x8] sm:$0xff]
  %v864 = vld [vmem:[%s2 + $0x10] sm:$0xff]
  %v865 = vld [vmem:[%s2 + $0x18] sm:$0xff]
  %v866 = vld [vmem:[%s2 + $0x20] sm:$0xff]
  %v867 = vld [vmem:[%s2 + $0x28] sm:$0xff]
  %v868 = vld [vmem:[%s2 + $0x30] sm:$0xff]
  %v869 = vld [vmem:[%s2 + $0x38] sm:$0xff]
  %v870 = vld [vmem:[%s2 + $0x40] sm:$0xff]
  %v871 = vld [vmem:[%s2 + $0x48] sm:$0xff]
  %v872 = vld [vmem:[%s2 + $0x50] sm:$0xff]
  %v873 = vld [vmem:[%s2 + $0x58] sm:$0xff]
  %v874 = vld [vmem:[%s2 + $0x60] sm:$0xff]
  %v875 = vld [vmem:[%s2 + $0x68] sm:$0xff]
  %v876 = vld [vmem:[%s2 + $0x70] sm:$0xff]
  %v877 = vld [vmem:[%s2 + $0x78] sm:$0xff]
  %v878 = vld [vmem:[%s2 + $0x80] sm:$0xff]
  %v879 = vld [vmem:[%s2 + $0x88] sm:$0xff]
  %v880 = vld [vmem:[%s2 + $0x90] sm:$0xff]
  %v881 = vld [vmem:[%s2 + $0x98] sm:$0xff]
  %v882 = vld [vmem:[%s2 + $0xa0] sm:$0xff]
  %v883 = vld [vmem:[%s2 + $0xa8] sm:$0xff]
  %v884 = vld [vmem:[%s2 + $0xb0] sm:$0xff]
  %v885 = vld [vmem:[%s2 + $0xb8] sm:$0xff]
  %v886 = vld [vmem:[%s2 + $0xc0] sm:$0xff]
  %v887 = vld [vmem:[%s2 + $0xc8] sm:$0xff]
  %v888 = vld [vmem:[%s2 + $0xd0] sm:$0xff]
  %v889 = vld [vmem:[%s2 + $0xd8] sm:$0xff]
  %v890 = vld [vmem:[%s2 + $0xe0] sm:$0xff]
  %v891 = vld [vmem:[%s2 + $0xe8] sm:$0xff]
  %v892 = vld [vmem:[%s2 + $0xf0] sm:$0xff]
  %v893 = vld [vmem:[%s2 + $0xf8] sm:$0xff]
  %v894 = vld [vmem:[%s2 + $0x100] sm:$0xff]
  %v895 = vld [vmem:[%s2 + $0x108] sm:$0xff]
  %v896 = vld [vmem:[%s2 + $0x110] sm:$0xff]
  %v897 = vld [vmem:[%s2 + $0x118] sm:$0xff]
  %v898 = vld [vmem:[%s2 + $0x120] sm:$0xff]
  %v899 = vld [vmem:[%s2 + $0x128] sm:$0xf]
  %v900 = vld [vmem:[%s5] sm:$0xff]
  %v901 = vld [vmem:[%s5 + $0x8] sm:$0xff]
  %v902 = vld [vmem:[%s5 + $0x10] sm:$0xff]
  %vm903 = vcmask 195584
  %v905 = vsel %vm903, %v862, 0
  %v908 = vsel %vm903, %v863, 0
  %v911 = vsel %vm903, %v864, 0
  %v914 = vsel %vm903, %v865, 0
  %v917 = vsel %vm903, %v866, 0
  %v920 = vsel %vm903, %v867, 0
  %v923 = vsel %vm903, %v868, 0
  %v926 = vsel %vm903, %v869, 0
  %v929 = vsel %vm903, %v870, 0
  %v932 = vsel %vm903, %v871, 0
  %v935 = vsel %vm903, %v872, 0
  %v938 = vsel %vm903, %v873, 0
  %v941 = vsel %vm903, %v874, 0
  %v944 = vsel %vm903, %v875, 0
  %v947 = vsel %vm903, %v876, 0
  %v950 = vsel %vm903, %v877, 0
  %v953 = vsel %vm903, %v878, 0
  %v956 = vsel %vm903, %v879, 0
  %v959 = vsel %vm903, %v880, 0
  %v962 = vsel %vm903, %v881, 0
  %v965 = vsel %vm903, %v882, 0
  %v968 = vsel %vm903, %v883, 0
  %v971 = vsel %vm903, %v884, 0
  %v974 = vsel %vm903, %v885, 0
  %v977 = vsel %vm903, %v886, 0
  %v980 = vsel %vm903, %v887, 0
  %v983 = vsel %vm903, %v888, 0
  %v986 = vsel %vm903, %v889, 0
  %v989 = vsel %vm903, %v890, 0
  %v992 = vsel %vm903, %v891, 0
  %v995 = vsel %vm903, %v892, 0
  %v998 = vsel %vm903, %v893, 0
  %v1001 = vsel %vm903, %v894, 0
  %v1004 = vsel %vm903, %v895, 0
  %v1007 = vsel %vm903, %v896, 0
  %v1010 = vsel %vm903, %v897, 0
  %v1013 = vsel %vm903, %v898, 0
  %v1016 = vsel %vm903, %v899, 0
  %1018 = vmatprep.subr.mxu0 0.0
  %1019 = vmatpush1.msra.mxu0 %v900
  %1020 = vmatprep.subr.mxu0 0.0
  %1021 = vmatpush1.msra.mxu0 %v901
  %1022 = vmatprep.subr.mxu0 0.0
  %1023 = vmatpush1.msra.mxu0 %v902
  %1024 = vmatprep.subr.mxu0 0.0
  %1025 = vmatpush1.msra.mxu0 0.0
  %1026 = vmatprep.subr.mxu0 0.0
  %1027 = vmatpush1.msra.mxu0 0.0
  %1028 = vmatprep.subr.mxu0 0.0
  %1029 = vmatpush1.msra.mxu0 0.0
  %1030 = vmatprep.subr.mxu0 0.0
  %1031 = vmatpush1.msra.mxu0 0.0
  %1032 = vmatprep.subr.mxu0 0.0
  %1033 = vmatpush1.msra.mxu0 0.0
  %1034 = vmatprep.subr.mxu0 0.0
  %1035 = vmatpush1.msra.mxu0 0.0
  %1036 = vmatprep.subr.mxu0 0.0
  %1037 = vmatpush1.msra.mxu0 0.0
  %1038 = vmatprep.subr.mxu0 0.0
  %1039 = vmatpush1.msra.mxu0 0.0
  %1040 = vmatprep.subr.mxu0 0.0
  %1041 = vmatpush1.msra.mxu0 0.0
  %1042 = vmatprep.subr.mxu0 0.0
  %1043 = vmatpush1.msra.mxu0 0.0
  %1044 = vmatprep.subr.mxu0 0.0
  %1045 = vmatpush1.msra.mxu0 0.0
  %1046 = vmatprep.subr.mxu0 0.0
  %1047 = vmatpush1.msra.mxu0 0.0
  %1048 = vmatprep.subr.mxu0 0.0
  %1049 = vmatpush1.msra.mxu0 0.0
  %1050 = vmatprep.subr.mxu0 0.0
  %1051 = vmatpush1.msra.mxu0 0.0
  %1052 = vmatprep.subr.mxu0 0.0
  %1053 = vmatpush1.msra.mxu0 0.0
  %1054 = vmatprep.subr.mxu0 0.0
  %1055 = vmatpush1.msra.mxu0 0.0
  %1056 = vmatprep.subr.mxu0 0.0
  %1057 = vmatpush1.msra.mxu0 0.0
  %1058 = vmatprep.subr.mxu0 0.0
  %1059 = vmatpush1.msra.mxu0 0.0
  %1060 = vmatprep.subr.mxu0 0.0
  %1061 = vmatpush1.msra.mxu0 0.0
  %1062 = vmatprep.subr.mxu0 0.0
  %1063 = vmatpush1.msra.mxu0 0.0
  %1064 = vmatprep.subr.mxu0 0.0
  %1065 = vmatpush1.msra.mxu0 0.0
  %1066 = vmatprep.subr.mxu0 0.0
  %1067 = vmatpush1.msra.mxu0 0.0
  %1068 = vmatprep.subr.mxu0 0.0
  %1069 = vmatpush1.msra.mxu0 0.0
  %1070 = vmatprep.subr.mxu0 0.0
  %1071 = vmatpush1.msra.mxu0 0.0
  %1072 = vmatprep.subr.mxu0 0.0
  %1073 = vmatpush1.msra.mxu0 0.0
  %1074 = vmatprep.subr.mxu0 0.0
  %1075 = vmatpush1.msra.mxu0 0.0
  %1076 = vmatprep.subr.mxu0 0.0
  %1077 = vmatpush1.msra.mxu0 0.0
  %1078 = vmatprep.subr.mxu0 0.0
  %1079 = vmatpush1.msra.mxu0 0.0
  %1080 = vmatprep.subr.mxu0 0.0
  %1081 = vmatpush1.msra.mxu0 0.0
  %1082 = vmatprep.mubr.f32.mxu0 0.0
  %1083 = vmatmul.mubr.f32.gmra.mrb[0].mxu0 %v905
  %v1084 = vpop.f32.mrb[0].mxu0
  %v1085 = vadd.f32 0.0, %v1084
  %v1086 = vpop.f32.mrb[0].mxu0
  %1087 = vmatprep.mubr.f32.mxu0 0.0
  %1088 = vmatmul.mubr.f32.gmra.mrb[0].mxu0 %v908
  %v1089 = vpop.f32.mrb[0].mxu0
  %v1090 = vadd.f32 0.0, %v1089
  %v1091 = vpop.f32.mrb[0].mxu0
  %1092 = vmatprep.mubr.f32.mxu0 0.0
  %1093 = vmatmul.mubr.f32.gmra.mrb[0].mxu0 %v911
  %v1094 = vpop.f32.mrb[0].mxu0
  %v1095 = vadd.f32 0.0, %v1094
  %v1096 = vpop.f32.mrb[0].mxu0
  %1097 = vmatprep.mubr.f32.mxu0 0.0
  %1098 = vmatmul.mubr.f32.gmra.mrb[0].mxu0 %v914
  %v1099 = vpop.f32.mrb[0].mxu0
  %v1100 = vadd.f32 0.0, %v1099
  %v1101 = vpop.f32.mrb[0].mxu0
  %1102 = vmatprep.mubr.f32.mxu0 0.0
  %1103 = vmatmul.mubr.f32.gmra.mrb[0].mxu0 %v917
  %v1104 = vpop.f32.mrb[0].mxu0
  %v1105 = vadd.f32 0.0, %v1104
  %v1106 = vpop.f32.mrb[0].mxu0
  %1107 = vmatprep.mubr.f32.mxu0 0.0
  %1108 = vmatmul.mubr.f32.gmra.mrb[0].mxu0 %v920
  %v1109 = vpop.f32.mrb[0].mxu0
  %v1110 = vadd.f32 0.0, %v1109
  %v1111 = vpop.f32.mrb[0].mxu0
  %1112 = vmatprep.mubr.f32.mxu0 0.0
  %1113 = vmatmul.mubr.f32.gmra.mrb[0].mxu0 %v923
  %v1114 = vpop.f32.mrb[0].mxu0
  %v1115 = vadd.f32 0.0, %v1114
  %v1116 = vpop.f32.mrb[0].mxu0
  %1117 = vmatprep.mubr.f32.mxu0 0.0
  %1118 = vmatmul.mubr.f32.gmra.mrb[0].mxu0 %v926
  %v1119 = vpop.f32.mrb[0].mxu0
  %v1120 = vadd.f32 0.0, %v1119
  %v1121 = vpop.f32.mrb[0].mxu0
  %1122 = vmatprep.mubr.f32.mxu0 0.0
  %1123 = vmatmul.mubr.f32.gmra.mrb[0].mxu0 %v929
  %v1124 = vpop.f32.mrb[0].mxu0
  %v1125 = vadd.f32 0.0, %v1124
  %v1126 = vpop.f32.mrb[0].mxu0
  %1127 = vmatprep.mubr.f32.mxu0 0.0
  %1128 = vmatmul.mubr.f32.gmra.mrb[0].mxu0 %v932
  %v1129 = vpop.f32.mrb[0].mxu0
  %v1130 = vadd.f32 0.0, %v1129
  %v1131 = vpop.f32.mrb[0].mxu0
  %1132 = vmatprep.mubr.f32.mxu0 0.0
  %1133 = vmatmul.mubr.f32.gmra.mrb[0].mxu0 %v935
  %v1134 = vpop.f32.mrb[0].mxu0
  %v1135 = vadd.f32 0.0, %v1134
  %v1136 = vpop.f32.mrb[0].mxu0
  %1137 = vmatprep.mubr.f32.mxu0 0.0
  %1138 = vmatmul.mubr.f32.gmra.mrb[0].mxu0 %v938
  %v1139 = vpop.f32.mrb[0].mxu0
  %v1140 = vadd.f32 0.0, %v1139
  %v1141 = vpop.f32.mrb[0].mxu0
  %1142 = vmatprep.mubr.f32.mxu0 0.0
  %1143 = vmatmul.mubr.f32.gmra.mrb[0].mxu0 %v941
  %v1144 = vpop.f32.mrb[0].mxu0
  %v1145 = vadd.f32 0.0, %v1144
  %v1146 = vpop.f32.mrb[0].mxu0
  %1147 = vmatprep.mubr.f32.mxu0 0.0
  %1148 = vmatmul.mubr.f32.gmra.mrb[0].mxu0 %v944
  %v1149 = vpop.f32.mrb[0].mxu0
  %v1150 = vadd.f32 0.0, %v1149
  %v1151 = vpop.f32.mrb[0].mxu0
  %1152 = vmatprep.mubr.f32.mxu0 0.0
  %1153 = vmatmul.mubr.f32.gmra.mrb[0].mxu0 %v947
  %v1154 = vpop.f32.mrb[0].mxu0
  %v1155 = vadd.f32 0.0, %v1154
  %v1156 = vpop.f32.mrb[0].mxu0
  %1157 = vmatprep.mubr.f32.mxu0 0.0
  %1158 = vmatmul.mubr.f32.gmra.mrb[0].mxu0 %v950
  %v1159 = vpop.f32.mrb[0].mxu0
  %v1160 = vadd.f32 0.0, %v1159
  %v1161 = vpop.f32.mrb[0].mxu0
  %1162 = vmatprep.mubr.f32.mxu0 0.0
  %1163 = vmatmul.mubr.f32.gmra.mrb[0].mxu0 %v953
  %v1164 = vpop.f32.mrb[0].mxu0
  %v1165 = vadd.f32 0.0, %v1164
  %v1166 = vpop.f32.mrb[0].mxu0
  %1167 = vmatprep.mubr.f32.mxu0 0.0
  %1168 = vmatmul.mubr.f32.gmra.mrb[0].mxu0 %v956
  %v1169 = vpop.f32.mrb[0].mxu0
  %v1170 = vadd.f32 0.0, %v1169
  %v1171 = vpop.f32.mrb[0].mxu0
  %1172 = vmatprep.mubr.f32.mxu0 0.0
  %1173 = vmatmul.mubr.f32.gmra.mrb[0].mxu0 %v959
  %v1174 = vpop.f32.mrb[0].mxu0
  %v1175 = vadd.f32 0.0, %v1174
  %v1176 = vpop.f32.mrb[0].mxu0
  %1177 = vmatprep.mubr.f32.mxu0 0.0
  %1178 = vmatmul.mubr.f32.gmra.mrb[0].mxu0 %v962
  %v1179 = vpop.f32.mrb[0].mxu0
  %v1180 = vadd.f32 0.0, %v1179
  %v1181 = vpop.f32.mrb[0].mxu0
  %1182 = vmatprep.mubr.f32.mxu0 0.0
  %1183 = vmatmul.mubr.f32.gmra.mrb[0].mxu0 %v965
  %v1184 = vpop.f32.mrb[0].mxu0
  %v1185 = vadd.f32 0.0, %v1184
  %v1186 = vpop.f32.mrb[0].mxu0
  %1187 = vmatprep.mubr.f32.mxu0 0.0
  %1188 = vmatmul.mubr.f32.gmra.mrb[0].mxu0 %v968
  %v1189 = vpop.f32.mrb[0].mxu0
  %v1190 = vadd.f32 0.0, %v1189
  %v1191 = vpop.f32.mrb[0].mxu0
  %1192 = vmatprep.mubr.f32.mxu0 0.0
  %1193 = vmatmul.mubr.f32.gmra.mrb[0].mxu0 %v971
  %v1194 = vpop.f32.mrb[0].mxu0
  %v1195 = vadd.f32 0.0, %v1194
  %v1196 = vpop.f32.mrb[0].mxu0
  %1197 = vmatprep.mubr.f32.mxu0 0.0
  %1198 = vmatmul.mubr.f32.gmra.mrb[0].mxu0 %v974
  %v1199 = vpop.f32.mrb[0].mxu0
  %v1200 = vadd.f32 0.0, %v1199
  %v1201 = vpop.f32.mrb[0].mxu0
  %1202 = vmatprep.mubr.f32.mxu0 0.0
  %1203 = vmatmul.mubr.f32.gmra.mrb[0].mxu0 %v977
  %v1204 = vpop.f32.mrb[0].mxu0
  %v1205 = vadd.f32 0.0, %v1204
  %v1206 = vpop.f32.mrb[0].mxu0
  %1207 = vmatprep.mubr.f32.mxu0 0.0
  %1208 = vmatmul.mubr.f32.gmra.mrb[0].mxu0 %v980
  %v1209 = vpop.f32.mrb[0].mxu0
  %v1210 = vadd.f32 0.0, %v1209
  %v1211 = vpop.f32.mrb[0].mxu0
  %1212 = vmatprep.mubr.f32.mxu0 0.0
  %1213 = vmatmul.mubr.f32.gmra.mrb[0].mxu0 %v983
  %v1214 = vpop.f32.mrb[0].mxu0
  %v1215 = vadd.f32 0.0, %v1214
  %v1216 = vpop.f32.mrb[0].mxu0
  %1217 = vmatprep.mubr.f32.mxu0 0.0
  %1218 = vmatmul.mubr.f32.gmra.mrb[0].mxu0 %v986
  %v1219 = vpop.f32.mrb[0].mxu0
  %v1220 = vadd.f32 0.0, %v1219
  %v1221 = vpop.f32.mrb[0].mxu0
  %1222 = vmatprep.mubr.f32.mxu0 0.0
  %1223 = vmatmul.mubr.f32.gmra.mrb[0].mxu0 %v989
  %v1224 = vpop.f32.mrb[0].mxu0
  %v1225 = vadd.f32 0.0, %v1224
  %v1226 = vpop.f32.mrb[0].mxu0
  %1227 = vmatprep.mubr.f32.mxu0 0.0
  %1228 = vmatmul.mubr.f32.gmra.mrb[0].mxu0 %v992
  %v1229 = vpop.f32.mrb[0].mxu0
  %v1230 = vadd.f32 0.0, %v1229
  %v1231 = vpop.f32.mrb[0].mxu0
  %1232 = vmatprep.mubr.f32.mxu0 0.0
  %1233 = vmatmul.mubr.f32.gmra.mrb[0].mxu0 %v995
  %v1234 = vpop.f32.mrb[0].mxu0
  %v1235 = vadd.f32 0.0, %v1234
  %v1236 = vpop.f32.mrb[0].mxu0
  %1237 = vmatprep.mubr.f32.mxu0 0.0
  %1238 = vmatmul.mubr.f32.gmra.mrb[0].mxu0 %v998
  %v1239 = vpop.f32.mrb[0].mxu0
  %v1240 = vadd.f32 0.0, %v1239
  %v1241 = vpop.f32.mrb[0].mxu0
  %1242 = vmatprep.mubr.f32.mxu0 0.0
  %1243 = vmatmul.mubr.f32.gmra.mrb[0].mxu0 %v1001
  %v1244 = vpop.f32.mrb[0].mxu0
  %v1245 = vadd.f32 0.0, %v1244
  %v1246 = vpop.f32.mrb[0].mxu0
  %1247 = vmatprep.mubr.f32.mxu0 0.0
  %1248 = vmatmul.mubr.f32.gmra.mrb[0].mxu0 %v1004
  %v1249 = vpop.f32.mrb[0].mxu0
  %v1250 = vadd.f32 0.0, %v1249
  %v1251 = vpop.f32.mrb[0].mxu0
  %1252 = vmatprep.mubr.f32.mxu0 0.0
  %1253 = vmatmul.mubr.f32.gmra.mrb[0].mxu0 %v1007
  %v1254 = vpop.f32.mrb[0].mxu0
  %v1255 = vadd.f32 0.0, %v1254
  %v1256 = vpop.f32.mrb[0].mxu0
  %1257 = vmatprep.mubr.f32.mxu0 0.0
  %1258 = vmatmul.mubr.f32.gmra.mrb[0].mxu0 %v1010
  %v1259 = vpop.f32.mrb[0].mxu0
  %v1260 = vadd.f32 0.0, %v1259
  %v1261 = vpop.f32.mrb[0].mxu0
  %1262 = vmatprep.mubr.f32.mxu0 0.0
  %1263 = vmatmul.mubr.f32.gmra.mrb[0].mxu0 %v1013
  %v1264 = vpop.f32.mrb[0].mxu0
  %v1265 = vadd.f32 0.0, %v1264
  %v1266 = vpop.f32.mrb[0].mxu0
  %1267 = vmatprep.mubr.f32.mxu0 0.0
  %1268 = vmatmul.mubr.f32.gmra.mrb[0].mxu0 %v1016
  %v1269 = vpop.f32.mrb[0].mxu0
  %v1270 = vadd.f32 0.0, %v1269
  %v1271 = vpop.f32.mrb[0].mxu0
  %1272 = vdwg.mxu0
  %v1273 = vadd.f32 %v674, %v1085
  %v1274 = vadd.f32 %v679, %v1090
  %v1275 = vadd.f32 %v684, %v1095
  %v1276 = vadd.f32 %v689, %v1100
  %v1277 = vadd.f32 %v694, %v1105
  %v1278 = vadd.f32 %v699, %v1110
  %v1279 = vadd.f32 %v704, %v1115
  %v1280 = vadd.f32 %v709, %v1120
  %v1281 = vadd.f32 %v714, %v1125
  %v1282 = vadd.f32 %v719, %v1130
  %v1283 = vadd.f32 %v724, %v1135
  %v1284 = vadd.f32 %v729, %v1140
  %v1285 = vadd.f32 %v734, %v1145
  %v1286 = vadd.f32 %v739, %v1150
  %v1287 = vadd.f32 %v744, %v1155
  %v1288 = vadd.f32 %v749, %v1160
  %v1289 = vadd.f32 %v754, %v1165
  %v1290 = vadd.f32 %v759, %v1170
  %v1291 = vadd.f32 %v764, %v1175
  %v1292 = vadd.f32 %v769, %v1180
  %v1293 = vadd.f32 %v774, %v1185
  %v1294 = vadd.f32 %v779, %v1190
  %v1295 = vadd.f32 %v784, %v1195
  %v1296 = vadd.f32 %v789, %v1200
  %v1297 = vadd.f32 %v794, %v1205
  %v1298 = vadd.f32 %v799, %v1210
  %v1299 = vadd.f32 %v804, %v1215
  %v1300 = vadd.f32 %v809, %v1220
  %v1301 = vadd.f32 %v814, %v1225
  %v1302 = vadd.f32 %v819, %v1230
  %v1303 = vadd.f32 %v824, %v1235
  %v1304 = vadd.f32 %v829, %v1240
  %v1305 = vadd.f32 %v834, %v1245
  %v1306 = vadd.f32 %v839, %v1250
  %v1307 = vadd.f32 %v844, %v1255
  %v1308 = vadd.f32 %v849, %v1260
  %v1309 = vadd.f32 %v854, %v1265
  %v1310 = vadd.f32 %v859, %v1270
  %v1311 = vld [vmem:[%s6] sm:$0x1]
  %v1313 = vlaneseq
  %v1314 = vshrl.u32 %v1313, 7
  %v1315 = vsub.s32 0, %v1314
  %v1316 = vrot.slane %v1311, %v1315
  %v1318 = vadd.f32 %v1273, %v1316
  %v1319 = vadd.f32 %v1274, %v1316
  %v1320 = vadd.f32 %v1275, %v1316
  %v1321 = vadd.f32 %v1276, %v1316
  %v1322 = vadd.f32 %v1277, %v1316
  %v1323 = vadd.f32 %v1278, %v1316
  %v1324 = vadd.f32 %v1279, %v1316
  %v1325 = vadd.f32 %v1280, %v1316
  %v1326 = vadd.f32 %v1281, %v1316
  %v1327 = vadd.f32 %v1282, %v1316
  %v1328 = vadd.f32 %v1283, %v1316
  %v1329 = vadd.f32 %v1284, %v1316
  %v1330 = vadd.f32 %v1285, %v1316
  %v1331 = vadd.f32 %v1286, %v1316
  %v1332 = vadd.f32 %v1287, %v1316
  %v1333 = vadd.f32 %v1288, %v1316
  %v1334 = vadd.f32 %v1289, %v1316
  %v1335 = vadd.f32 %v1290, %v1316
  %v1336 = vadd.f32 %v1291, %v1316
  %v1337 = vadd.f32 %v1292, %v1316
  %v1338 = vadd.f32 %v1293, %v1316
  %v1339 = vadd.f32 %v1294, %v1316
  %v1340 = vadd.f32 %v1295, %v1316
  %v1341 = vadd.f32 %v1296, %v1316
  %v1342 = vadd.f32 %v1297, %v1316
  %v1343 = vadd.f32 %v1298, %v1316
  %v1344 = vadd.f32 %v1299, %v1316
  %v1345 = vadd.f32 %v1300, %v1316
  %v1346 = vadd.f32 %v1301, %v1316
  %v1347 = vadd.f32 %v1302, %v1316
  %v1348 = vadd.f32 %v1303, %v1316
  %v1349 = vadd.f32 %v1304, %v1316
  %v1350 = vadd.f32 %v1305, %v1316
  %v1351 = vadd.f32 %v1306, %v1316
  %v1352 = vadd.f32 %v1307, %v1316
  %v1353 = vadd.f32 %v1308, %v1316
  %v1354 = vadd.f32 %v1309, %v1316
  %v1355 = vadd.f32 %v1310, %v1316
  %v1356 = vtanh.pop %v1318
  %v1357 = vtanh.pop %v1319
  %v1358 = vtanh.pop %v1320
  %v1359 = vtanh.pop %v1321
  %v1360 = vtanh.pop %v1322
  %v1361 = vtanh.pop %v1323
  %v1362 = vtanh.pop %v1324
  %v1363 = vtanh.pop %v1325
  %v1364 = vtanh.pop %v1326
  %v1365 = vtanh.pop %v1327
  %v1366 = vtanh.pop %v1328
  %v1367 = vtanh.pop %v1329
  %v1368 = vtanh.pop %v1330
  %v1369 = vtanh.pop %v1331
  %v1370 = vtanh.pop %v1332
  %v1371 = vtanh.pop %v1333
  %v1372 = vtanh.pop %v1334
  %v1373 = vtanh.pop %v1335
  %v1374 = vtanh.pop %v1336
  %v1375 = vtanh.pop %v1337
  %v1376 = vtanh.pop %v1338
  %v1377 = vtanh.pop %v1339
  %v1378 = vtanh.pop %v1340
  %v1379 = vtanh.pop %v1341
  %v1380 = vtanh.pop %v1342
  %v1381 = vtanh.pop %v1343
  %v1382 = vtanh.pop %v1344
  %v1383 = vtanh.pop %v1345
  %v1384 = vtanh.pop %v1346
  %v1385 = vtanh.pop %v1347
  %v1386 = vtanh.pop %v1348
  %v1387 = vtanh.pop %v1349
  %v1388 = vtanh.pop %v1350
  %v1389 = vtanh.pop %v1351
  %v1390 = vtanh.pop %v1352
  %v1391 = vtanh.pop %v1353
  %v1392 = vtanh.pop %v1354
  %v1393 = vtanh.pop %v1355
  %v1394 = vld [vmem:[%s7] sm:$0xff]
  %v1395 = vld [vmem:[%s7 + $0x8] sm:$0x3f]
  %v1396 = vld [vmem:[%s8] sm:$0x1]
  %v1398 = vlaneseq
  %v1399 = vshrl.u32 %v1398, 7
  %v1400 = vsub.s32 0, %v1399
  %v1401 = vrot.slane %v1396, %v1400
  %vm1403 = vcmask 113664
  %v1405 = vsel %vm1403, %v1356, 0
  %v1408 = vsel %vm1403, %v1357, 0
  %v1411 = vsel %vm1403, %v1358, 0
  %v1414 = vsel %vm1403, %v1359, 0
  %v1417 = vsel %vm1403, %v1360, 0
  %v1420 = vsel %vm1403, %v1361, 0
  %v1423 = vsel %vm1403, %v1362, 0
  %v1426 = vsel %vm1403, %v1363, 0
  %v1429 = vsel %vm1403, %v1364, 0
  %v1432 = vsel %vm1403, %v1365, 0
  %v1435 = vsel %vm1403, %v1366, 0
  %v1438 = vsel %vm1403, %v1367, 0
  %v1441 = vsel %vm1403, %v1368, 0
  %v1444 = vsel %vm1403, %v1369, 0
  %v1447 = vsel %vm1403, %v1370, 0
  %v1450 = vsel %vm1403, %v1371, 0
  %v1453 = vsel %vm1403, %v1372, 0
  %v1456 = vsel %vm1403, %v1373, 0
  %v1459 = vsel %vm1403, %v1374, 0
  %v1462 = vsel %vm1403, %v1375, 0
  %v1465 = vsel %vm1403, %v1376, 0
  %v1468 = vsel %vm1403, %v1377, 0
  %v1471 = vsel %vm1403, %v1378, 0
  %v1474 = vsel %vm1403, %v1379, 0
  %v1477 = vsel %vm1403, %v1380, 0
  %v1480 = vsel %vm1403, %v1381, 0
  %v1483 = vsel %vm1403, %v1382, 0
  %v1486 = vsel %vm1403, %v1383, 0
  %v1489 = vsel %vm1403, %v1384, 0
  %v1492 = vsel %vm1403, %v1385, 0
  %v1495 = vsel %vm1403, %v1386, 0
  %v1498 = vsel %vm1403, %v1387, 0
  %v1501 = vsel %vm1403, %v1388, 0
  %v1504 = vsel %vm1403, %v1389, 0
  %v1507 = vsel %vm1403, %v1390, 0
  %v1510 = vsel %vm1403, %v1391, 0
  %v1513 = vsel %vm1403, %v1392, 0
  %v1516 = vsel %vm1403, %v1393, 0
  %vm1518 = vcmask 1045504
  %v1520 = vsel %vm1518, %v1395, 0
  %1522 = vmatprep.subr.mxu0 0.0
  %1523 = vmatpush1.msra.mxu0 %v1394
  %1524 = vmatprep.subr.mxu0 0.0
  %1525 = vmatpush1.msra.mxu0 %v1520
  %1526 = vmatprep.subr.mxu0 0.0
  %1527 = vmatpush1.msra.mxu0 0.0
  %1528 = vmatprep.subr.mxu0 0.0
  %1529 = vmatpush1.msra.mxu0 0.0
  %1530 = vmatprep.subr.mxu0 0.0
  %1531 = vmatpush1.msra.mxu0 0.0
  %1532 = vmatprep.subr.mxu0 0.0
  %1533 = vmatpush1.msra.mxu0 0.0
  %1534 = vmatprep.subr.mxu0 0.0
  %1535 = vmatpush1.msra.mxu0 0.0
  %1536 = vmatprep.subr.mxu0 0.0
  %1537 = vmatpush1.msra.mxu0 0.0
  %1538 = vmatprep.subr.mxu0 0.0
  %1539 = vmatpush1.msra.mxu0 0.0
  %1540 = vmatprep.subr.mxu0 0.0
  %1541 = vmatpush1.msra.mxu0 0.0
  %1542 = vmatprep.subr.mxu0 0.0
  %1543 = vmatpush1.msra.mxu0 0.0
  %1544 = vmatprep.subr.mxu0 0.0
  %1545 = vmatpush1.msra.mxu0 0.0
  %1546 = vmatprep.subr.mxu0 0.0
  %1547 = vmatpush1.msra.mxu0 0.0
  %1548 = vmatprep.subr.mxu0 0.0
  %1549 = vmatpush1.msra.mxu0 0.0
  %1550 = vmatprep.subr.mxu0 0.0
  %1551 = vmatpush1.msra.mxu0 0.0
  %1552 = vmatprep.subr.mxu0 0.0
  %1553 = vmatpush1.msra.mxu0 0.0
  %1554 = vmatprep.subr.mxu0 0.0
  %1555 = vmatpush1.msra.mxu0 0.0
  %1556 = vmatprep.subr.mxu0 0.0
  %1557 = vmatpush1.msra.mxu0 0.0
  %1558 = vmatprep.subr.mxu0 0.0
  %1559 = vmatpush1.msra.mxu0 0.0
  %1560 = vmatprep.subr.mxu0 0.0
  %1561 = vmatpush1.msra.mxu0 0.0
  %1562 = vmatprep.subr.mxu0 0.0
  %1563 = vmatpush1.msra.mxu0 0.0
  %1564 = vmatprep.subr.mxu0 0.0
  %1565 = vmatpush1.msra.mxu0 0.0
  %1566 = vmatprep.subr.mxu0 0.0
  %1567 = vmatpush1.msra.mxu0 0.0
  %1568 = vmatprep.subr.mxu0 0.0
  %1569 = vmatpush1.msra.mxu0 0.0
  %1570 = vmatprep.subr.mxu0 0.0
  %1571 = vmatpush1.msra.mxu0 0.0
  %1572 = vmatprep.subr.mxu0 0.0
  %1573 = vmatpush1.msra.mxu0 0.0
  %1574 = vmatprep.subr.mxu0 0.0
  %1575 = vmatpush1.msra.mxu0 0.0
  %1576 = vmatprep.subr.mxu0 0.0
  %1577 = vmatpush1.msra.mxu0 0.0
  %1578 = vmatprep.subr.mxu0 0.0
  %1579 = vmatpush1.msra.mxu0 0.0
  %1580 = vmatprep.subr.mxu0 0.0
  %1581 = vmatpush1.msra.mxu0 0.0
  %1582 = vmatprep.subr.mxu0 0.0
  %1583 = vmatpush1.msra.mxu0 0.0
  %1584 = vmatprep.subr.mxu0 0.0
  %1585 = vmatpush1.msra.mxu0 0.0
  %1586 = vmatprep.mubr.f32.mxu0 0.0
  %1587 = vmatmul.mubr.f32.gmra.mrb[0].mxu0 %v1405
  %v1588 = vpop.f32.mrb[0].mxu0
  %v1589 = vadd.f32 %v1401, %v1588
  %v1590 = vpop.f32.mrb[0].mxu0
  %1591 = vmatprep.mubr.f32.mxu0 0.0
  %1592 = vmatmul.mubr.f32.gmra.mrb[0].mxu0 %v1408
  %v1593 = vpop.f32.mrb[0].mxu0
  %v1594 = vadd.f32 %v1401, %v1593
  %v1595 = vpop.f32.mrb[0].mxu0
  %1596 = vmatprep.mubr.f32.mxu0 0.0
  %1597 = vmatmul.mubr.f32.gmra.mrb[0].mxu0 %v1411
  %v1598 = vpop.f32.mrb[0].mxu0
  %v1599 = vadd.f32 %v1401, %v1598
  %v1600 = vpop.f32.mrb[0].mxu0
  %1601 = vmatprep.mubr.f32.mxu0 0.0
  %1602 = vmatmul.mubr.f32.gmra.mrb[0].mxu0 %v1414
  %v1603 = vpop.f32.mrb[0].mxu0
  %v1604 = vadd.f32 %v1401, %v1603
  %v1605 = vpop.f32.mrb[0].mxu0
  %1606 = vmatprep.mubr.f32.mxu0 0.0
  %1607 = vmatmul.mubr.f32.gmra.mrb[0].mxu0 %v1417
  %v1608 = vpop.f32.mrb[0].mxu0
  %v1609 = vadd.f32 %v1401, %v1608
  %v1610 = vpop.f32.mrb[0].mxu0
  %1611 = vmatprep.mubr.f32.mxu0 0.0
  %1612 = vmatmul.mubr.f32.gmra.mrb[0].mxu0 %v1420
  %v1613 = vpop.f32.mrb[0].mxu0
  %v1614 = vadd.f32 %v1401, %v1613
  %v1615 = vpop.f32.mrb[0].mxu0
  %1616 = vmatprep.mubr.f32.mxu0 0.0
  %1617 = vmatmul.mubr.f32.gmra.mrb[0].mxu0 %v1423
  %v1618 = vpop.f32.mrb[0].mxu0
  %v1619 = vadd.f32 %v1401, %v1618
  %v1620 = vpop.f32.mrb[0].mxu0
  %1621 = vmatprep.mubr.f32.mxu0 0.0
  %1622 = vmatmul.mubr.f32.gmra.mrb[0].mxu0 %v1426
  %v1623 = vpop.f32.mrb[0].mxu0
  %v1624 = vadd.f32 %v1401, %v1623
  %v1625 = vpop.f32.mrb[0].mxu0
  %1626 = vmatprep.mubr.f32.mxu0 0.0
  %1627 = vmatmul.mubr.f32.gmra.mrb[0].mxu0 %v1429
  %v1628 = vpop.f32.mrb[0].mxu0
  %v1629 = vadd.f32 %v1401, %v1628
  %v1630 = vpop.f32.mrb[0].mxu0
  %1631 = vmatprep.mubr.f32.mxu0 0.0
  %1632 = vmatmul.mubr.f32.gmra.mrb[0].mxu0 %v1432
  %v1633 = vpop.f32.mrb[0].mxu0
  %v1634 = vadd.f32 %v1401, %v1633
  %v1635 = vpop.f32.mrb[0].mxu0
  %1636 = vmatprep.mubr.f32.mxu0 0.0
  %1637 = vmatmul.mubr.f32.gmra.mrb[0].mxu0 %v1435
  %v1638 = vpop.f32.mrb[0].mxu0
  %v1639 = vadd.f32 %v1401, %v1638
  %v1640 = vpop.f32.mrb[0].mxu0
  %1641 = vmatprep.mubr.f32.mxu0 0.0
  %1642 = vmatmul.mubr.f32.gmra.mrb[0].mxu0 %v1438
  %v1643 = vpop.f32.mrb[0].mxu0
  %v1644 = vadd.f32 %v1401, %v1643
  %v1645 = vpop.f32.mrb[0].mxu0
  %1646 = vmatprep.mubr.f32.mxu0 0.0
  %1647 = vmatmul.mubr.f32.gmra.mrb[0].mxu0 %v1441
  %v1648 = vpop.f32.mrb[0].mxu0
  %v1649 = vadd.f32 %v1401, %v1648
  %v1650 = vpop.f32.mrb[0].mxu0
  %1651 = vmatprep.mubr.f32.mxu0 0.0
  %1652 = vmatmul.mubr.f32.gmra.mrb[0].mxu0 %v1444
  %v1653 = vpop.f32.mrb[0].mxu0
  %v1654 = vadd.f32 %v1401, %v1653
  %v1655 = vpop.f32.mrb[0].mxu0
  %1656 = vmatprep.mubr.f32.mxu0 0.0
  %1657 = vmatmul.mubr.f32.gmra.mrb[0].mxu0 %v1447
  %v1658 = vpop.f32.mrb[0].mxu0
  %v1659 = vadd.f32 %v1401, %v1658
  %v1660 = vpop.f32.mrb[0].mxu0
  %1661 = vmatprep.mubr.f32.mxu0 0.0
  %1662 = vmatmul.mubr.f32.gmra.mrb[0].mxu0 %v1450
  %v1663 = vpop.f32.mrb[0].mxu0
  %v1664 = vadd.f32 %v1401, %v1663
  %v1665 = vpop.f32.mrb[0].mxu0
  %1666 = vmatprep.mubr.f32.mxu0 0.0
  %1667 = vmatmul.mubr.f32.gmra.mrb[0].mxu0 %v1453
  %v1668 = vpop.f32.mrb[0].mxu0
  %v1669 = vadd.f32 %v1401, %v1668
  %v1670 = vpop.f32.mrb[0].mxu0
  %1671 = vmatprep.mubr.f32.mxu0 0.0
  %1672 = vmatmul.mubr.f32.gmra.mrb[0].mxu0 %v1456
  %v1673 = vpop.f32.mrb[0].mxu0
  %v1674 = vadd.f32 %v1401, %v1673
  %v1675 = vpop.f32.mrb[0].mxu0
  %1676 = vmatprep.mubr.f32.mxu0 0.0
  %1677 = vmatmul.mubr.f32.gmra.mrb[0].mxu0 %v1459
  %v1678 = vpop.f32.mrb[0].mxu0
  %v1679 = vadd.f32 %v1401, %v1678
  %v1680 = vpop.f32.mrb[0].mxu0
  %1681 = vmatprep.mubr.f32.mxu0 0.0
  %1682 = vmatmul.mubr.f32.gmra.mrb[0].mxu0 %v1462
  %v1683 = vpop.f32.mrb[0].mxu0
  %v1684 = vadd.f32 %v1401, %v1683
  %v1685 = vpop.f32.mrb[0].mxu0
  %1686 = vmatprep.mubr.f32.mxu0 0.0
  %1687 = vmatmul.mubr.f32.gmra.mrb[0].mxu0 %v1465
  %v1688 = vpop.f32.mrb[0].mxu0
  %v1689 = vadd.f32 %v1401, %v1688
  %v1690 = vpop.f32.mrb[0].mxu0
  %1691 = vmatprep.mubr.f32.mxu0 0.0
  %1692 = vmatmul.mubr.f32.gmra.mrb[0].mxu0 %v1468
  %v1693 = vpop.f32.mrb[0].mxu0
  %v1694 = vadd.f32 %v1401, %v1693
  %v1695 = vpop.f32.mrb[0].mxu0
  %1696 = vmatprep.mubr.f32.mxu0 0.0
  %1697 = vmatmul.mubr.f32.gmra.mrb[0].mxu0 %v1471
  %v1698 = vpop.f32.mrb[0].mxu0
  %v1699 = vadd.f32 %v1401, %v1698
  %v1700 = vpop.f32.mrb[0].mxu0
  %1701 = vmatprep.mubr.f32.mxu0 0.0
  %1702 = vmatmul.mubr.f32.gmra.mrb[0].mxu0 %v1474
  %v1703 = vpop.f32.mrb[0].mxu0
  %v1704 = vadd.f32 %v1401, %v1703
  %v1705 = vpop.f32.mrb[0].mxu0
  %1706 = vmatprep.mubr.f32.mxu0 0.0
  %1707 = vmatmul.mubr.f32.gmra.mrb[0].mxu0 %v1477
  %v1708 = vpop.f32.mrb[0].mxu0
  %v1709 = vadd.f32 %v1401, %v1708
  %v1710 = vpop.f32.mrb[0].mxu0
  %1711 = vmatprep.mubr.f32.mxu0 0.0
  %1712 = vmatmul.mubr.f32.gmra.mrb[0].mxu0 %v1480
  %v1713 = vpop.f32.mrb[0].mxu0
  %v1714 = vadd.f32 %v1401, %v1713
  %v1715 = vpop.f32.mrb[0].mxu0
  %1716 = vmatprep.mubr.f32.mxu0 0.0
  %1717 = vmatmul.mubr.f32.gmra.mrb[0].mxu0 %v1483
  %v1718 = vpop.f32.mrb[0].mxu0
  %v1719 = vadd.f32 %v1401, %v1718
  %v1720 = vpop.f32.mrb[0].mxu0
  %1721 = vmatprep.mubr.f32.mxu0 0.0
  %1722 = vmatmul.mubr.f32.gmra.mrb[0].mxu0 %v1486
  %v1723 = vpop.f32.mrb[0].mxu0
  %v1724 = vadd.f32 %v1401, %v1723
  %v1725 = vpop.f32.mrb[0].mxu0
  %1726 = vmatprep.mubr.f32.mxu0 0.0
  %1727 = vmatmul.mubr.f32.gmra.mrb[0].mxu0 %v1489
  %v1728 = vpop.f32.mrb[0].mxu0
  %v1729 = vadd.f32 %v1401, %v1728
  %v1730 = vpop.f32.mrb[0].mxu0
  %1731 = vmatprep.mubr.f32.mxu0 0.0
  %1732 = vmatmul.mubr.f32.gmra.mrb[0].mxu0 %v1492
  %v1733 = vpop.f32.mrb[0].mxu0
  %v1734 = vadd.f32 %v1401, %v1733
  %v1735 = vpop.f32.mrb[0].mxu0
  %1736 = vmatprep.mubr.f32.mxu0 0.0
  %1737 = vmatmul.mubr.f32.gmra.mrb[0].mxu0 %v1495
  %v1738 = vpop.f32.mrb[0].mxu0
  %v1739 = vadd.f32 %v1401, %v1738
  %v1740 = vpop.f32.mrb[0].mxu0
  %1741 = vmatprep.mubr.f32.mxu0 0.0
  %1742 = vmatmul.mubr.f32.gmra.mrb[0].mxu0 %v1498
  %v1743 = vpop.f32.mrb[0].mxu0
  %v1744 = vadd.f32 %v1401, %v1743
  %v1745 = vpop.f32.mrb[0].mxu0
  %1746 = vmatprep.mubr.f32.mxu0 0.0
  %1747 = vmatmul.mubr.f32.gmra.mrb[0].mxu0 %v1501
  %v1748 = vpop.f32.mrb[0].mxu0
  %v1749 = vadd.f32 %v1401, %v1748
  %v1750 = vpop.f32.mrb[0].mxu0
  %1751 = vmatprep.mubr.f32.mxu0 0.0
  %1752 = vmatmul.mubr.f32.gmra.mrb[0].mxu0 %v1504
  %v1753 = vpop.f32.mrb[0].mxu0
  %v1754 = vadd.f32 %v1401, %v1753
  %v1755 = vpop.f32.mrb[0].mxu0
  %1756 = vmatprep.mubr.f32.mxu0 0.0
  %1757 = vmatmul.mubr.f32.gmra.mrb[0].mxu0 %v1507
  %v1758 = vpop.f32.mrb[0].mxu0
  %v1759 = vadd.f32 %v1401, %v1758
  %v1760 = vpop.f32.mrb[0].mxu0
  %1761 = vmatprep.mubr.f32.mxu0 0.0
  %1762 = vmatmul.mubr.f32.gmra.mrb[0].mxu0 %v1510
  %v1763 = vpop.f32.mrb[0].mxu0
  %v1764 = vadd.f32 %v1401, %v1763
  %v1765 = vpop.f32.mrb[0].mxu0
  %1766 = vmatprep.mubr.f32.mxu0 0.0
  %1767 = vmatmul.mubr.f32.gmra.mrb[0].mxu0 %v1513
  %v1768 = vpop.f32.mrb[0].mxu0
  %v1769 = vadd.f32 %v1401, %v1768
  %v1770 = vpop.f32.mrb[0].mxu0
  %1771 = vmatprep.mubr.f32.mxu0 0.0
  %1772 = vmatmul.mubr.f32.gmra.mrb[0].mxu0 %v1516
  %v1773 = vpop.f32.mrb[0].mxu0
  %v1774 = vadd.f32 %v1401, %v1773
  %v1775 = vpop.f32.mrb[0].mxu0
  %1776 = vdwg.mxu0
  %v1777 = vtanh.pop %v1589
  %v1778 = vtanh.pop %v1594
  %v1779 = vtanh.pop %v1599
  %v1780 = vtanh.pop %v1604
  %v1781 = vtanh.pop %v1609
  %v1782 = vtanh.pop %v1614
  %v1783 = vtanh.pop %v1619
  %v1784 = vtanh.pop %v1624
  %v1785 = vtanh.pop %v1629
  %v1786 = vtanh.pop %v1634
  %v1787 = vtanh.pop %v1639
  %v1788 = vtanh.pop %v1644
  %v1789 = vtanh.pop %v1649
  %v1790 = vtanh.pop %v1654
  %v1791 = vtanh.pop %v1659
  %v1792 = vtanh.pop %v1664
  %v1793 = vtanh.pop %v1669
  %v1794 = vtanh.pop %v1674
  %v1795 = vtanh.pop %v1679
  %v1796 = vtanh.pop %v1684
  %v1797 = vtanh.pop %v1689
  %v1798 = vtanh.pop %v1694
  %v1799 = vtanh.pop %v1699
  %v1800 = vtanh.pop %v1704
  %v1801 = vtanh.pop %v1709
  %v1802 = vtanh.pop %v1714
  %v1803 = vtanh.pop %v1719
  %v1804 = vtanh.pop %v1724
  %v1805 = vtanh.pop %v1729
  %v1806 = vtanh.pop %v1734
  %v1807 = vtanh.pop %v1739
  %v1808 = vtanh.pop %v1744
  %v1809 = vtanh.pop %v1749
  %v1810 = vtanh.pop %v1754
  %v1811 = vtanh.pop %v1759
  %v1812 = vtanh.pop %v1764
  %v1813 = vtanh.pop %v1769
  %v1814 = vtanh.pop %v1774
  %v1815 = vld [vmem:[%s9] sm:$0x7f]
  %v1816 = vld [vmem:[#allocation2] sm:$0x1]
  %v1818 = vlaneseq
  %v1819 = vshrl.u32 %v1818, 7
  %v1820 = vsub.s32 0, %v1819
  %v1821 = vrot.slane %v1816, %v1820
  %vm1823 = vcmask 56320
  %v1825 = vsel %vm1823, %v1777, 0
  %v1828 = vsel %vm1823, %v1778, 0
  %v1831 = vsel %vm1823, %v1779, 0
  %v1834 = vsel %vm1823, %v1780, 0
  %v1837 = vsel %vm1823, %v1781, 0
  %v1840 = vsel %vm1823, %v1782, 0
  %v1843 = vsel %vm1823, %v1783, 0
  %v1846 = vsel %vm1823, %v1784, 0
  %v1849 = vsel %vm1823, %v1785, 0
  %v1852 = vsel %vm1823, %v1786, 0
  %v1855 = vsel %vm1823, %v1787, 0
  %v1858 = vsel %vm1823, %v1788, 0
  %v1861 = vsel %vm1823, %v1789, 0
  %v1864 = vsel %vm1823, %v1790, 0
  %v1867 = vsel %vm1823, %v1791, 0
  %v1870 = vsel %vm1823, %v1792, 0
  %v1873 = vsel %vm1823, %v1793, 0
  %v1876 = vsel %vm1823, %v1794, 0
  %v1879 = vsel %vm1823, %v1795, 0
  %v1882 = vsel %vm1823, %v1796, 0
  %v1885 = vsel %vm1823, %v1797, 0
  %v1888 = vsel %vm1823, %v1798, 0
  %v1891 = vsel %vm1823, %v1799, 0
  %v1894 = vsel %vm1823, %v1800, 0
  %v1897 = vsel %vm1823, %v1801, 0
  %v1900 = vsel %vm1823, %v1802, 0
  %v1903 = vsel %vm1823, %v1803, 0
  %v1906 = vsel %vm1823, %v1804, 0
  %v1909 = vsel %vm1823, %v1805, 0
  %v1912 = vsel %vm1823, %v1806, 0
  %v1915 = vsel %vm1823, %v1807, 0
  %v1918 = vsel %vm1823, %v1808, 0
  %v1921 = vsel %vm1823, %v1809, 0
  %v1924 = vsel %vm1823, %v1810, 0
  %v1927 = vsel %vm1823, %v1811, 0
  %v1930 = vsel %vm1823, %v1812, 0
  %v1933 = vsel %vm1823, %v1813, 0
  %v1936 = vsel %vm1823, %v1814, 0
  %vm1938 = vcmask 1046528
  %v1940 = vsel %vm1938, %v1815, 0
  %1942 = vmatprep.subr.mxu0 0.0
  %1943 = vmatpush1.msra.mxu0 %v1940
  %1944 = vmatprep.subr.mxu0 0.0
  %1945 = vmatpush1.msra.mxu0 0.0
  %1946 = vmatprep.subr.mxu0 0.0
  %1947 = vmatpush1.msra.mxu0 0.0
  %1948 = vmatprep.subr.mxu0 0.0
  %1949 = vmatpush1.msra.mxu0 0.0
  %1950 = vmatprep.subr.mxu0 0.0
  %1951 = vmatpush1.msra.mxu0 0.0
  %1952 = vmatprep.subr.mxu0 0.0
  %1953 = vmatpush1.msra.mxu0 0.0
  %1954 = vmatprep.subr.mxu0 0.0
  %1955 = vmatpush1.msra.mxu0 0.0
  %1956 = vmatprep.subr.mxu0 0.0
  %1957 = vmatpush1.msra.mxu0 0.0
  %1958 = vmatprep.subr.mxu0 0.0
  %1959 = vmatpush1.msra.mxu0 0.0
  %1960 = vmatprep.subr.mxu0 0.0
  %1961 = vmatpush1.msra.mxu0 0.0
  %1962 = vmatprep.subr.mxu0 0.0
  %1963 = vmatpush1.msra.mxu0 0.0
  %1964 = vmatprep.subr.mxu0 0.0
  %1965 = vmatpush1.msra.mxu0 0.0
  %1966 = vmatprep.subr.mxu0 0.0
  %1967 = vmatpush1.msra.mxu0 0.0
  %1968 = vmatprep.subr.mxu0 0.0
  %1969 = vmatpush1.msra.mxu0 0.0
  %1970 = vmatprep.subr.mxu0 0.0
  %1971 = vmatpush1.msra.mxu0 0.0
  %1972 = vmatprep.subr.mxu0 0.0
  %1973 = vmatpush1.msra.mxu0 0.0
  %1974 = vmatprep.subr.mxu0 0.0
  %1975 = vmatpush1.msra.mxu0 0.0
  %1976 = vmatprep.subr.mxu0 0.0
  %1977 = vmatpush1.msra.mxu0 0.0
  %1978 = vmatprep.subr.mxu0 0.0
  %1979 = vmatpush1.msra.mxu0 0.0
  %1980 = vmatprep.subr.mxu0 0.0
  %1981 = vmatpush1.msra.mxu0 0.0
  %1982 = vmatprep.subr.mxu0 0.0
  %1983 = vmatpush1.msra.mxu0 0.0
  %1984 = vmatprep.subr.mxu0 0.0
  %1985 = vmatpush1.msra.mxu0 0.0
  %1986 = vmatprep.subr.mxu0 0.0
  %1987 = vmatpush1.msra.mxu0 0.0
  %1988 = vmatprep.subr.mxu0 0.0
  %1989 = vmatpush1.msra.mxu0 0.0
  %1990 = vmatprep.subr.mxu0 0.0
  %1991 = vmatpush1.msra.mxu0 0.0
  %1992 = vmatprep.subr.mxu0 0.0
  %1993 = vmatpush1.msra.mxu0 0.0
  %1994 = vmatprep.subr.mxu0 0.0
  %1995 = vmatpush1.msra.mxu0 0.0
  %1996 = vmatprep.subr.mxu0 0.0
  %1997 = vmatpush1.msra.mxu0 0.0
  %1998 = vmatprep.subr.mxu0 0.0
  %1999 = vmatpush1.msra.mxu0 0.0
  %2000 = vmatprep.subr.mxu0 0.0
  %2001 = vmatpush1.msra.mxu0 0.0
  %2002 = vmatprep.subr.mxu0 0.0
  %2003 = vmatpush1.msra.mxu0 0.0
  %2004 = vmatprep.subr.mxu0 0.0
  %2005 = vmatpush1.msra.mxu0 0.0
  %2006 = vmatprep.mubr.f32.mxu0 0.0
  %2007 = vmatmul.mubr.f32.gmra.mrb[0].mxu0 %v1825
  %v2008 = vpop.f32.mrb[0].mxu0
  %v2009 = vadd.f32 %v1821, %v2008
  %v2010 = vpop.f32.mrb[0].mxu0
  %2011 = vmatprep.mubr.f32.mxu0 0.0
  %2012 = vmatmul.mubr.f32.gmra.mrb[0].mxu0 %v1828
  %v2013 = vpop.f32.mrb[0].mxu0
  %v2014 = vadd.f32 %v1821, %v2013
  %v2015 = vpop.f32.mrb[0].mxu0
  %2016 = vmatprep.mubr.f32.mxu0 0.0
  %2017 = vmatmul.mubr.f32.gmra.mrb[0].mxu0 %v1831
  %v2018 = vpop.f32.mrb[0].mxu0
  %v2019 = vadd.f32 %v1821, %v2018
  %v2020 = vpop.f32.mrb[0].mxu0
  %2021 = vmatprep.mubr.f32.mxu0 0.0
  %2022 = vmatmul.mubr.f32.gmra.mrb[0].mxu0 %v1834
  %v2023 = vpop.f32.mrb[0].mxu0
  %v2024 = vadd.f32 %v1821, %v2023
  %v2025 = vpop.f32.mrb[0].mxu0
  %2026 = vmatprep.mubr.f32.mxu0 0.0
  %2027 = vmatmul.mubr.f32.gmra.mrb[0].mxu0 %v1837
  %v2028 = vpop.f32.mrb[0].mxu0
  %v2029 = vadd.f32 %v1821, %v2028
  %v2030 = vpop.f32.mrb[0].mxu0
  %2031 = vmatprep.mubr.f32.mxu0 0.0
  %2032 = vmatmul.mubr.f32.gmra.mrb[0].mxu0 %v1840
  %v2033 = vpop.f32.mrb[0].mxu0
  %v2034 = vadd.f32 %v1821, %v2033
  %v2035 = vpop.f32.mrb[0].mxu0
  %2036 = vmatprep.mubr.f32.mxu0 0.0
  %2037 = vmatmul.mubr.f32.gmra.mrb[0].mxu0 %v1843
  %v2038 = vpop.f32.mrb[0].mxu0
  %v2039 = vadd.f32 %v1821, %v2038
  %v2040 = vpop.f32.mrb[0].mxu0
  %2041 = vmatprep.mubr.f32.mxu0 0.0
  %2042 = vmatmul.mubr.f32.gmra.mrb[0].mxu0 %v1846
  %v2043 = vpop.f32.mrb[0].mxu0
  %v2044 = vadd.f32 %v1821, %v2043
  %v2045 = vpop.f32.mrb[0].mxu0
  %2046 = vmatprep.mubr.f32.mxu0 0.0
  %2047 = vmatmul.mubr.f32.gmra.mrb[0].mxu0 %v1849
  %v2048 = vpop.f32.mrb[0].mxu0
  %v2049 = vadd.f32 %v1821, %v2048
  %v2050 = vpop.f32.mrb[0].mxu0
  %2051 = vmatprep.mubr.f32.mxu0 0.0
  %2052 = vmatmul.mubr.f32.gmra.mrb[0].mxu0 %v1852
  %v2053 = vpop.f32.mrb[0].mxu0
  %v2054 = vadd.f32 %v1821, %v2053
  %v2055 = vpop.f32.mrb[0].mxu0
  %2056 = vmatprep.mubr.f32.mxu0 0.0
  %2057 = vmatmul.mubr.f32.gmra.mrb[0].mxu0 %v1855
  %v2058 = vpop.f32.mrb[0].mxu0
  %v2059 = vadd.f32 %v1821, %v2058
  %v2060 = vpop.f32.mrb[0].mxu0
  %2061 = vmatprep.mubr.f32.mxu0 0.0
  %2062 = vmatmul.mubr.f32.gmra.mrb[0].mxu0 %v1858
  %v2063 = vpop.f32.mrb[0].mxu0
  %v2064 = vadd.f32 %v1821, %v2063
  %v2065 = vpop.f32.mrb[0].mxu0
  %2066 = vmatprep.mubr.f32.mxu0 0.0
  %2067 = vmatmul.mubr.f32.gmra.mrb[0].mxu0 %v1861
  %v2068 = vpop.f32.mrb[0].mxu0
  %v2069 = vadd.f32 %v1821, %v2068
  %v2070 = vpop.f32.mrb[0].mxu0
  %2071 = vmatprep.mubr.f32.mxu0 0.0
  %2072 = vmatmul.mubr.f32.gmra.mrb[0].mxu0 %v1864
  %v2073 = vpop.f32.mrb[0].mxu0
  %v2074 = vadd.f32 %v1821, %v2073
  %v2075 = vpop.f32.mrb[0].mxu0
  %2076 = vmatprep.mubr.f32.mxu0 0.0
  %2077 = vmatmul.mubr.f32.gmra.mrb[0].mxu0 %v1867
  %v2078 = vpop.f32.mrb[0].mxu0
  %v2079 = vadd.f32 %v1821, %v2078
  %v2080 = vpop.f32.mrb[0].mxu0
  %2081 = vmatprep.mubr.f32.mxu0 0.0
  %2082 = vmatmul.mubr.f32.gmra.mrb[0].mxu0 %v1870
  %v2083 = vpop.f32.mrb[0].mxu0
  %v2084 = vadd.f32 %v1821, %v2083
  %v2085 = vpop.f32.mrb[0].mxu0
  %2086 = vmatprep.mubr.f32.mxu0 0.0
  %2087 = vmatmul.mubr.f32.gmra.mrb[0].mxu0 %v1873
  %v2088 = vpop.f32.mrb[0].mxu0
  %v2089 = vadd.f32 %v1821, %v2088
  %v2090 = vpop.f32.mrb[0].mxu0
  %2091 = vmatprep.mubr.f32.mxu0 0.0
  %2092 = vmatmul.mubr.f32.gmra.mrb[0].mxu0 %v1876
  %v2093 = vpop.f32.mrb[0].mxu0
  %v2094 = vadd.f32 %v1821, %v2093
  %v2095 = vpop.f32.mrb[0].mxu0
  %2096 = vmatprep.mubr.f32.mxu0 0.0
  %2097 = vmatmul.mubr.f32.gmra.mrb[0].mxu0 %v1879
  %v2098 = vpop.f32.mrb[0].mxu0
  %v2099 = vadd.f32 %v1821, %v2098
  %v2100 = vpop.f32.mrb[0].mxu0
  %2101 = vmatprep.mubr.f32.mxu0 0.0
  %2102 = vmatmul.mubr.f32.gmra.mrb[0].mxu0 %v1882
  %v2103 = vpop.f32.mrb[0].mxu0
  %v2104 = vadd.f32 %v1821, %v2103
  %v2105 = vpop.f32.mrb[0].mxu0
  %2106 = vmatprep.mubr.f32.mxu0 0.0
  %2107 = vmatmul.mubr.f32.gmra.mrb[0].mxu0 %v1885
  %v2108 = vpop.f32.mrb[0].mxu0
  %v2109 = vadd.f32 %v1821, %v2108
  %v2110 = vpop.f32.mrb[0].mxu0
  %2111 = vmatprep.mubr.f32.mxu0 0.0
  %2112 = vmatmul.mubr.f32.gmra.mrb[0].mxu0 %v1888
  %v2113 = vpop.f32.mrb[0].mxu0
  %v2114 = vadd.f32 %v1821, %v2113
  %v2115 = vpop.f32.mrb[0].mxu0
  %2116 = vmatprep.mubr.f32.mxu0 0.0
  %2117 = vmatmul.mubr.f32.gmra.mrb[0].mxu0 %v1891
  %v2118 = vpop.f32.mrb[0].mxu0
  %v2119 = vadd.f32 %v1821, %v2118
  %v2120 = vpop.f32.mrb[0].mxu0
  %2121 = vmatprep.mubr.f32.mxu0 0.0
  %2122 = vmatmul.mubr.f32.gmra.mrb[0].mxu0 %v1894
  %v2123 = vpop.f32.mrb[0].mxu0
  %v2124 = vadd.f32 %v1821, %v2123
  %v2125 = vpop.f32.mrb[0].mxu0
  %2126 = vmatprep.mubr.f32.mxu0 0.0
  %2127 = vmatmul.mubr.f32.gmra.mrb[0].mxu0 %v1897
  %v2128 = vpop.f32.mrb[0].mxu0
  %v2129 = vadd.f32 %v1821, %v2128
  %v2130 = vpop.f32.mrb[0].mxu0
  %2131 = vmatprep.mubr.f32.mxu0 0.0
  %2132 = vmatmul.mubr.f32.gmra.mrb[0].mxu0 %v1900
  %v2133 = vpop.f32.mrb[0].mxu0
  %v2134 = vadd.f32 %v1821, %v2133
  %v2135 = vpop.f32.mrb[0].mxu0
  %2136 = vmatprep.mubr.f32.mxu0 0.0
  %2137 = vmatmul.mubr.f32.gmra.mrb[0].mxu0 %v1903
  %v2138 = vpop.f32.mrb[0].mxu0
  %v2139 = vadd.f32 %v1821, %v2138
  %v2140 = vpop.f32.mrb[0].mxu0
  %2141 = vmatprep.mubr.f32.mxu0 0.0
  %2142 = vmatmul.mubr.f32.gmra.mrb[0].mxu0 %v1906
  %v2143 = vpop.f32.mrb[0].mxu0
  %v2144 = vadd.f32 %v1821, %v2143
  %v2145 = vpop.f32.mrb[0].mxu0
  %2146 = vmatprep.mubr.f32.mxu0 0.0
  %2147 = vmatmul.mubr.f32.gmra.mrb[0].mxu0 %v1909
  %v2148 = vpop.f32.mrb[0].mxu0
  %v2149 = vadd.f32 %v1821, %v2148
  %v2150 = vpop.f32.mrb[0].mxu0
  %2151 = vmatprep.mubr.f32.mxu0 0.0
  %2152 = vmatmul.mubr.f32.gmra.mrb[0].mxu0 %v1912
  %v2153 = vpop.f32.mrb[0].mxu0
  %v2154 = vadd.f32 %v1821, %v2153
  %v2155 = vpop.f32.mrb[0].mxu0
  %2156 = vmatprep.mubr.f32.mxu0 0.0
  %2157 = vmatmul.mubr.f32.gmra.mrb[0].mxu0 %v1915
  %v2158 = vpop.f32.mrb[0].mxu0
  %v2159 = vadd.f32 %v1821, %v2158
  %v2160 = vpop.f32.mrb[0].mxu0
  %2161 = vmatprep.mubr.f32.mxu0 0.0
  %2162 = vmatmul.mubr.f32.gmra.mrb[0].mxu0 %v1918
  %v2163 = vpop.f32.mrb[0].mxu0
  %v2164 = vadd.f32 %v1821, %v2163
  %v2165 = vpop.f32.mrb[0].mxu0
  %2166 = vmatprep.mubr.f32.mxu0 0.0
  %2167 = vmatmul.mubr.f32.gmra.mrb[0].mxu0 %v1921
  %v2168 = vpop.f32.mrb[0].mxu0
  %v2169 = vadd.f32 %v1821, %v2168
  %v2170 = vpop.f32.mrb[0].mxu0
  %2171 = vmatprep.mubr.f32.mxu0 0.0
  %2172 = vmatmul.mubr.f32.gmra.mrb[0].mxu0 %v1924
  %v2173 = vpop.f32.mrb[0].mxu0
  %v2174 = vadd.f32 %v1821, %v2173
  %v2175 = vpop.f32.mrb[0].mxu0
  %2176 = vmatprep.mubr.f32.mxu0 0.0
  %2177 = vmatmul.mubr.f32.gmra.mrb[0].mxu0 %v1927
  %v2178 = vpop.f32.mrb[0].mxu0
  %v2179 = vadd.f32 %v1821, %v2178
  %v2180 = vpop.f32.mrb[0].mxu0
  %2181 = vmatprep.mubr.f32.mxu0 0.0
  %2182 = vmatmul.mubr.f32.gmra.mrb[0].mxu0 %v1930
  %v2183 = vpop.f32.mrb[0].mxu0
  %v2184 = vadd.f32 %v1821, %v2183
  %v2185 = vpop.f32.mrb[0].mxu0
  %2186 = vmatprep.mubr.f32.mxu0 0.0
  %2187 = vmatmul.mubr.f32.gmra.mrb[0].mxu0 %v1933
  %v2188 = vpop.f32.mrb[0].mxu0
  %v2189 = vadd.f32 %v1821, %v2188
  %v2190 = vpop.f32.mrb[0].mxu0
  %2191 = vmatprep.mubr.f32.mxu0 0.0
  %2192 = vmatmul.mubr.f32.gmra.mrb[0].mxu0 %v1936
  %v2193 = vpop.f32.mrb[0].mxu0
  %v2194 = vadd.f32 %v1821, %v2193
  %v2195 = vpop.f32.mrb[0].mxu0
  %2196 = vdwg.mxu0
  %v2197 = vxor.u32 %v2009, 2147483648
  %v2198 = vxor.u32 %v2014, 2147483648
  %v2199 = vxor.u32 %v2019, 2147483648
  %v2200 = vxor.u32 %v2024, 2147483648
  %v2201 = vxor.u32 %v2029, 2147483648
  %v2202 = vxor.u32 %v2034, 2147483648
  %v2203 = vxor.u32 %v2039, 2147483648
  %v2204 = vxor.u32 %v2044, 2147483648
  %v2205 = vxor.u32 %v2049, 2147483648
  %v2206 = vxor.u32 %v2054, 2147483648
  %v2207 = vxor.u32 %v2059, 2147483648
  %v2208 = vxor.u32 %v2064, 2147483648
  %v2209 = vxor.u32 %v2069, 2147483648
  %v2210 = vxor.u32 %v2074, 2147483648
  %v2211 = vxor.u32 %v2079, 2147483648
  %v2212 = vxor.u32 %v2084, 2147483648
  %v2213 = vxor.u32 %v2089, 2147483648
  %v2214 = vxor.u32 %v2094, 2147483648
  %v2215 = vxor.u32 %v2099, 2147483648
  %v2216 = vxor.u32 %v2104, 2147483648
  %v2217 = vxor.u32 %v2109, 2147483648
  %v2218 = vxor.u32 %v2114, 2147483648
  %v2219 = vxor.u32 %v2119, 2147483648
  %v2220 = vxor.u32 %v2124, 2147483648
  %v2221 = vxor.u32 %v2129, 2147483648
  %v2222 = vxor.u32 %v2134, 2147483648
  %v2223 = vxor.u32 %v2139, 2147483648
  %v2224 = vxor.u32 %v2144, 2147483648
  %v2225 = vxor.u32 %v2149, 2147483648
  %v2226 = vxor.u32 %v2154, 2147483648
  %v2227 = vxor.u32 %v2159, 2147483648
  %v2228 = vxor.u32 %v2164, 2147483648
  %v2229 = vxor.u32 %v2169, 2147483648
  %v2230 = vxor.u32 %v2174, 2147483648
  %v2231 = vxor.u32 %v2179, 2147483648
  %v2232 = vxor.u32 %v2184, 2147483648
  %v2233 = vxor.u32 %v2189, 2147483648
  %v2234 = vxor.u32 %v2194, 2147483648
  %v2235 = vmul.f32 %v2197, 1.442695
  %v2236 = vpow.pop %v2235
  %v2237 = vmul.f32 %v2198, 1.442695
  %v2238 = vpow.pop %v2237
  %v2239 = vmul.f32 %v2199, 1.442695
  %v2240 = vpow.pop %v2239
  %v2241 = vmul.f32 %v2200, 1.442695
  %v2242 = vpow.pop %v2241
  %v2243 = vmul.f32 %v2201, 1.442695
  %v2244 = vpow.pop %v2243
  %v2245 = vmul.f32 %v2202, 1.442695
  %v2246 = vpow.pop %v2245
  %v2247 = vmul.f32 %v2203, 1.442695
  %v2248 = vpow.pop %v2247
  %v2249 = vmul.f32 %v2204, 1.442695
  %v2250 = vpow.pop %v2249
  %v2251 = vmul.f32 %v2205, 1.442695
  %v2252 = vpow.pop %v2251
  %v2253 = vmul.f32 %v2206, 1.442695
  %v2254 = vpow.pop %v2253
  %v2255 = vmul.f32 %v2207, 1.442695
  %v2256 = vpow.pop %v2255
  %v2257 = vmul.f32 %v2208, 1.442695
  %v2258 = vpow.pop %v2257
  %v2259 = vmul.f32 %v2209, 1.442695
  %v2260 = vpow.pop %v2259
  %v2261 = vmul.f32 %v2210, 1.442695
  %v2262 = vpow.pop %v2261
  %v2263 = vmul.f32 %v2211, 1.442695
  %v2264 = vpow.pop %v2263
  %v2265 = vmul.f32 %v2212, 1.442695
  %v2266 = vpow.pop %v2265
  %v2267 = vmul.f32 %v2213, 1.442695
  %v2268 = vpow.pop %v2267
  %v2269 = vmul.f32 %v2214, 1.442695
  %v2270 = vpow.pop %v2269
  %v2271 = vmul.f32 %v2215, 1.442695
  %v2272 = vpow.pop %v2271
  %v2273 = vmul.f32 %v2216, 1.442695
  %v2274 = vpow.pop %v2273
  %v2275 = vmul.f32 %v2217, 1.442695
  %v2276 = vpow.pop %v2275
  %v2277 = vmul.f32 %v2218, 1.442695
  %v2278 = vpow.pop %v2277
  %v2279 = vmul.f32 %v2219, 1.442695
  %v2280 = vpow.pop %v2279
  %v2281 = vmul.f32 %v2220, 1.442695
  %v2282 = vpow.pop %v2281
  %v2283 = vmul.f32 %v2221, 1.442695
  %v2284 = vpow.pop %v2283
  %v2285 = vmul.f32 %v2222, 1.442695
  %v2286 = vpow.pop %v2285
  %v2287 = vmul.f32 %v2223, 1.442695
  %v2288 = vpow.pop %v2287
  %v2289 = vmul.f32 %v2224, 1.442695
  %v2290 = vpow.pop %v2289
  %v2291 = vmul.f32 %v2225, 1.442695
  %v2292 = vpow.pop %v2291
  %v2293 = vmul.f32 %v2226, 1.442695
  %v2294 = vpow.pop %v2293
  %v2295 = vmul.f32 %v2227, 1.442695
  %v2296 = vpow.pop %v2295
  %v2297 = vmul.f32 %v2228, 1.442695
  %v2298 = vpow.pop %v2297
  %v2299 = vmul.f32 %v2229, 1.442695
  %v2300 = vpow.pop %v2299
  %v2301 = vmul.f32 %v2230, 1.442695
  %v2302 = vpow.pop %v2301
  %v2303 = vmul.f32 %v2231, 1.442695
  %v2304 = vpow.pop %v2303
  %v2305 = vmul.f32 %v2232, 1.442695
  %v2306 = vpow.pop %v2305
  %v2307 = vmul.f32 %v2233, 1.442695
  %v2308 = vpow.pop %v2307
  %v2309 = vmul.f32 %v2234, 1.442695
  %v2310 = vpow.pop %v2309
  %v2311 = vadd.f32 %v2236, 1.0
  %v2312 = vadd.f32 %v2238, 1.0
  %v2313 = vadd.f32 %v2240, 1.0
  %v2314 = vadd.f32 %v2242, 1.0
  %v2315 = vadd.f32 %v2244, 1.0
  %v2316 = vadd.f32 %v2246, 1.0
  %v2317 = vadd.f32 %v2248, 1.0
  %v2318 = vadd.f32 %v2250, 1.0
  %v2319 = vadd.f32 %v2252, 1.0
  %v2320 = vadd.f32 %v2254, 1.0
  %v2321 = vadd.f32 %v2256, 1.0
  %v2322 = vadd.f32 %v2258, 1.0
  %v2323 = vadd.f32 %v2260, 1.0
  %v2324 = vadd.f32 %v2262, 1.0
  %v2325 = vadd.f32 %v2264, 1.0
  %v2326 = vadd.f32 %v2266, 1.0
  %v2327 = vadd.f32 %v2268, 1.0
  %v2328 = vadd.f32 %v2270, 1.0
  %v2329 = vadd.f32 %v2272, 1.0
  %v2330 = vadd.f32 %v2274, 1.0
  %v2331 = vadd.f32 %v2276, 1.0
  %v2332 = vadd.f32 %v2278, 1.0
  %v2333 = vadd.f32 %v2280, 1.0
  %v2334 = vadd.f32 %v2282, 1.0
  %v2335 = vadd.f32 %v2284, 1.0
  %v2336 = vadd.f32 %v2286, 1.0
  %v2337 = vadd.f32 %v2288, 1.0
  %v2338 = vadd.f32 %v2290, 1.0
  %v2339 = vadd.f32 %v2292, 1.0
  %v2340 = vadd.f32 %v2294, 1.0
  %v2341 = vadd.f32 %v2296, 1.0
  %v2342 = vadd.f32 %v2298, 1.0
  %v2343 = vadd.f32 %v2300, 1.0
  %v2344 = vadd.f32 %v2302, 1.0
  %v2345 = vadd.f32 %v2304, 1.0
  %v2346 = vadd.f32 %v2306, 1.0
  %v2347 = vadd.f32 %v2308, 1.0
  %v2348 = vadd.f32 %v2310, 1.0
  %v2349 = vrcp.pop %v2311
  %v2350 = vmul.f32 1.0, %v2349
  %v2351 = vrcp.pop %v2312
  %v2352 = vmul.f32 1.0, %v2351
  %v2353 = vrcp.pop %v2313
  %v2354 = vmul.f32 1.0, %v2353
  %v2355 = vrcp.pop %v2314
  %v2356 = vmul.f32 1.0, %v2355
  %v2357 = vrcp.pop %v2315
  %v2358 = vmul.f32 1.0, %v2357
  %v2359 = vrcp.pop %v2316
  %v2360 = vmul.f32 1.0, %v2359
  %v2361 = vrcp.pop %v2317
  %v2362 = vmul.f32 1.0, %v2361
  %v2363 = vrcp.pop %v2318
  %v2364 = vmul.f32 1.0, %v2363
  %v2365 = vrcp.pop %v2319
  %v2366 = vmul.f32 1.0, %v2365
  %v2367 = vrcp.pop %v2320
  %v2368 = vmul.f32 1.0, %v2367
  %v2369 = vrcp.pop %v2321
  %v2370 = vmul.f32 1.0, %v2369
  %v2371 = vrcp.pop %v2322
  %v2372 = vmul.f32 1.0, %v2371
  %v2373 = vrcp.pop %v2323
  %v2374 = vmul.f32 1.0, %v2373
  %v2375 = vrcp.pop %v2324
  %v2376 = vmul.f32 1.0, %v2375
  %v2377 = vrcp.pop %v2325
  %v2378 = vmul.f32 1.0, %v2377
  %v2379 = vrcp.pop %v2326
  %v2380 = vmul.f32 1.0, %v2379
  %v2381 = vrcp.pop %v2327
  %v2382 = vmul.f32 1.0, %v2381
  %v2383 = vrcp.pop %v2328
  %v2384 = vmul.f32 1.0, %v2383
  %v2385 = vrcp.pop %v2329
  %v2386 = vmul.f32 1.0, %v2385
  %v2387 = vrcp.pop %v2330
  %v2388 = vmul.f32 1.0, %v2387
  %v2389 = vrcp.pop %v2331
  %v2390 = vmul.f32 1.0, %v2389
  %v2391 = vrcp.pop %v2332
  %v2392 = vmul.f32 1.0, %v2391
  %v2393 = vrcp.pop %v2333
  %v2394 = vmul.f32 1.0, %v2393
  %v2395 = vrcp.pop %v2334
  %v2396 = vmul.f32 1.0, %v2395
  %v2397 = vrcp.pop %v2335
  %v2398 = vmul.f32 1.0, %v2397
  %v2399 = vrcp.pop %v2336
  %v2400 = vmul.f32 1.0, %v2399
  %v2401 = vrcp.pop %v2337
  %v2402 = vmul.f32 1.0, %v2401
  %v2403 = vrcp.pop %v2338
  %v2404 = vmul.f32 1.0, %v2403
  %v2405 = vrcp.pop %v2339
  %v2406 = vmul.f32 1.0, %v2405
  %v2407 = vrcp.pop %v2340
  %v2408 = vmul.f32 1.0, %v2407
  %v2409 = vrcp.pop %v2341
  %v2410 = vmul.f32 1.0, %v2409
  %v2411 = vrcp.pop %v2342
  %v2412 = vmul.f32 1.0, %v2411
  %v2413 = vrcp.pop %v2343
  %v2414 = vmul.f32 1.0, %v2413
  %v2415 = vrcp.pop %v2344
  %v2416 = vmul.f32 1.0, %v2415
  %v2417 = vrcp.pop %v2345
  %v2418 = vmul.f32 1.0, %v2417
  %v2419 = vrcp.pop %v2346
  %v2420 = vmul.f32 1.0, %v2419
  %v2421 = vrcp.pop %v2347
  %v2422 = vmul.f32 1.0, %v2421
  %v2423 = vrcp.pop %v2348
  %v2424 = vmul.f32 1.0, %v2423
  %vm2425 = vcmask 7168
  %2426 = vst.msk [vmem:[%s11] sm:$0xff] %vm2425, %v2350
  %2427 = vst.msk [vmem:[%s11 + $0x8] sm:$0xff] %vm2425, %v2352
  %2428 = vst.msk [vmem:[%s11 + $0x10] sm:$0xff] %vm2425, %v2354
  %2429 = vst.msk [vmem:[%s11 + $0x18] sm:$0xff] %vm2425, %v2356
  %2430 = vst.msk [vmem:[%s11 + $0x20] sm:$0xff] %vm2425, %v2358
  %2431 = vst.msk [vmem:[%s11 + $0x28] sm:$0xff] %vm2425, %v2360
  %2432 = vst.msk [vmem:[%s11 + $0x30] sm:$0xff] %vm2425, %v2362
  %2433 = vst.msk [vmem:[%s11 + $0x38] sm:$0xff] %vm2425, %v2364
  %2434 = vst.msk [vmem:[%s11 + $0x40] sm:$0xff] %vm2425, %v2366
  %2435 = vst.msk [vmem:[%s11 + $0x48] sm:$0xff] %vm2425, %v2368
  %2436 = vst.msk [vmem:[%s11 + $0x50] sm:$0xff] %vm2425, %v2370
  %2437 = vst.msk [vmem:[%s11 + $0x58] sm:$0xff] %vm2425, %v2372
  %2438 = vst.msk [vmem:[%s11 + $0x60] sm:$0xff] %vm2425, %v2374
  %2439 = vst.msk [vmem:[%s11 + $0x68] sm:$0xff] %vm2425, %v2376
  %2440 = vst.msk [vmem:[%s11 + $0x70] sm:$0xff] %vm2425, %v2378
  %2441 = vst.msk [vmem:[%s11 + $0x78] sm:$0xff] %vm2425, %v2380
  %2442 = vst.msk [vmem:[%s11 + $0x80] sm:$0xff] %vm2425, %v2382
  %2443 = vst.msk [vmem:[%s11 + $0x88] sm:$0xff] %vm2425, %v2384
  %2444 = vst.msk [vmem:[%s11 + $0x90] sm:$0xff] %vm2425, %v2386
  %2445 = vst.msk [vmem:[%s11 + $0x98] sm:$0xff] %vm2425, %v2388
  %2446 = vst.msk [vmem:[%s11 + $0xa0] sm:$0xff] %vm2425, %v2390
  %2447 = vst.msk [vmem:[%s11 + $0xa8] sm:$0xff] %vm2425, %v2392
  %2448 = vst.msk [vmem:[%s11 + $0xb0] sm:$0xff] %vm2425, %v2394
  %2449 = vst.msk [vmem:[%s11 + $0xb8] sm:$0xff] %vm2425, %v2396
  %2450 = vst.msk [vmem:[%s11 + $0xc0] sm:$0xff] %vm2425, %v2398
  %2451 = vst.msk [vmem:[%s11 + $0xc8] sm:$0xff] %vm2425, %v2400
  %2452 = vst.msk [vmem:[%s11 + $0xd0] sm:$0xff] %vm2425, %v2402
  %2453 = vst.msk [vmem:[%s11 + $0xd8] sm:$0xff] %vm2425, %v2404
  %2454 = vst.msk [vmem:[%s11 + $0xe0] sm:$0xff] %vm2425, %v2406
  %2455 = vst.msk [vmem:[%s11 + $0xe8] sm:$0xff] %vm2425, %v2408
  %2456 = vst.msk [vmem:[%s11 + $0xf0] sm:$0xff] %vm2425, %v2410
  %2457 = vst.msk [vmem:[%s11 + $0xf8] sm:$0xff] %vm2425, %v2412
  %2458 = vst.msk [vmem:[%s11 + $0x100] sm:$0xff] %vm2425, %v2414
  %2459 = vst.msk [vmem:[%s11 + $0x108] sm:$0xff] %vm2425, %v2416
  %2460 = vst.msk [vmem:[%s11 + $0x110] sm:$0xff] %vm2425, %v2418
  %2461 = vst.msk [vmem:[%s11 + $0x118] sm:$0xff] %vm2425, %v2420
  %2462 = vst.msk [vmem:[%s11 + $0x120] sm:$0xff] %vm2425, %v2422
  %vm2463 = vcmask 3072
  %2464 = vst.msk [vmem:[%s11 + $0x128] sm:$0xf] %vm2463, %v2424
  // Predicated region
  $region46: #{tpu_custom_call.1} parent=0 // pred_check
    _
  $region47: #{tpu_custom_call.1} parent=0 // pred_check_branch
    %2466 = sbr.rel (0) target = $region49
  $region48: #{tpu_custom_call.1} parent=0 // pred_region
    _
  $region49: #{tpu_custom_call.1} parent=0 // pred_fallthru
    _
  // Predicated region
  $region50: #{tpu_custom_call.1} parent=0 // pred_check
    _
  $region51: #{tpu_custom_call.1} parent=0 // pred_check_branch
    %2468 = sbr.rel (0) target = $region53
  $region52: #{tpu_custom_call.1} parent=0 // pred_region
    _
  $region53: #{tpu_custom_call.1} parent=0 // pred_fallthru
    _

</llo_original>
